<compile_context>
chip_gen: v7x
topology: tpu7x:2x2x1
jax: 0.10.0
libtpu: 0.0.40
codegen_flags: <defaults>
</compile_context>

<pallas_src>
import functools

import jax
import jax.numpy as jnp
import numpy as np
from jax.experimental import pallas as pl
from jax.experimental.pallas import tpu as pltpu

BN_EPS = 1e-5
VMEM_LIMIT = 32 * 1024 * 1024  # safe on v5e/v6e/v7x; tiles are far smaller


def _round_up(x, m):
    return (x + m - 1) // m * m


def _pick_tile(dim, prefs):
    for p in prefs:
        if dim % p == 0:
            return p
    return dim


# ----------------------------------------------------------------------------
# Pallas kernels
# ----------------------------------------------------------------------------
def _matmul_stats_kernel(a_ref, w_ref, o_ref, stats_ref, acc_ref):
    """Tiled bf16 matmul (f32 accumulation) + per-channel sum / sum-of-squares.

    Grid: (j: Cout tiles [parallel], i: M tiles [arbitrary], k: K tiles
    [arbitrary, innermost reduction]).  stats_ref block is resident across
    (i, k) so the BN statistics are accumulated over the FULL M axis.
    """
    i = pl.program_id(1)
    k = pl.program_id(2)
    nk = pl.num_programs(2)

    @pl.when(k == 0)
    def _():
        acc_ref[...] = jnp.zeros_like(acc_ref)

    @pl.when(jnp.logical_and(i == 0, k == 0))
    def _():
        stats_ref[...] = jnp.zeros_like(stats_ref)

    acc_ref[...] += jnp.dot(a_ref[...], w_ref[...],
                            preferred_element_type=jnp.float32)

    @pl.when(k == nk - 1)
    def _():
        acc = acc_ref[...]
        o_ref[...] = acc
        s = jnp.sum(acc, axis=0, keepdims=True)          # (1, TN)
        ss = jnp.sum(acc * acc, axis=0, keepdims=True)   # (1, TN)
        row = jax.lax.broadcasted_iota(jnp.int32, stats_ref.shape, 0)
        stats_ref[...] += jnp.where(row == 0, s, jnp.where(row == 1, ss, 0.0))


def _bn_apply_kernel(x_ref, scale_ref, shift_ref, o_ref, *, relu):
    y = x_ref[...] * scale_ref[...] + shift_ref[...]
    if relu:
        y = jnp.maximum(y, 0.0)
    o_ref[...] = y.astype(o_ref.dtype)


def _bn_add_relu_kernel(x_ref, r_ref, sx_ref, bx_ref, sr_ref, br_ref, o_ref):
    # Fused: bn2-apply + downsample-bn-apply + residual add + final ReLU.
    y = (x_ref[...] * sx_ref[...] + bx_ref[...]
         + r_ref[...] * sr_ref[...] + br_ref[...])
    o_ref[...] = jnp.maximum(y, 0.0).astype(o_ref.dtype)


# ----------------------------------------------------------------------------
# Pallas wrappers
# ----------------------------------------------------------------------------
def conv_matmul_stats(a, w, *, tm=256):
    """a: (M, K), w: (K, Cout) -> (raw f32 (M_p, C_p), stats f32 (8, C_p))."""
    M, K = a.shape
    Kw, Cout = w.shape
    assert K == Kw
    if M < tm:
        tm = _round_up(M, 8)
    M_p = _round_up(M, tm)
    K_p = _round_up(K, 128)
    C_p = _round_up(Cout, 128)

    # Pad with zeros (exactly neutral for matmul and for the BN sums) and cast
    # to bf16 at the MXU boundary; accumulation stays f32 in VMEM scratch.
    a_p = jnp.pad(a.astype(jnp.bfloat16), ((0, M_p - M), (0, K_p - K)))
    w_p = jnp.pad(w.astype(jnp.bfloat16), ((0, K_p - K), (0, C_p - Cout)))

    tn = _pick_tile(C_p, (256, 128))
    tk = _pick_tile(K_p, (512, 256, 128))
    grid = (C_p // tn, M_p // tm, K_p // tk)

    out, stats = pl.pallas_call(
        _matmul_stats_kernel,
        out_shape=(jax.ShapeDtypeStruct((M_p, C_p), jnp.float32),
                   jax.ShapeDtypeStruct((8, C_p), jnp.float32)),
        grid=grid,
        in_specs=[pl.BlockSpec((tm, tk), lambda j, i, k: (i, k)),
                  pl.BlockSpec((tk, tn), lambda j, i, k: (k, j))],
        out_specs=(pl.BlockSpec((tm, tn), lambda j, i, k: (i, j)),
                   pl.BlockSpec((8, tn), lambda j, i, k: (0, j))),
        scratch_shapes=[pltpu.VMEM((tm, tn), jnp.float32)],
        compiler_params=pltpu.CompilerParams(
            dimension_semantics=("parallel", "arbitrary", "arbitrary"),
            vmem_limit_bytes=VMEM_LIMIT),
    )(a_p, w_p)
    return out, stats


def finalize_bn(stats, count, gamma, beta):
    """Fold train-mode BN stats (biased var) into per-channel scale/shift."""
    c_p = stats.shape[1]
    mean = stats[0] / count
    var = jnp.maximum(stats[1] / count - mean * mean, 0.0)
    inv = jax.lax.rsqrt(var + BN_EPS)
    g = jnp.pad(gamma.astype(jnp.float32), (0, c_p - gamma.shape[0]))
    b = jnp.pad(beta.astype(jnp.float32), (0, c_p - beta.shape[0]))
    scale = g * inv
    shift = b - mean * scale
    return scale.reshape(1, c_p), shift.reshape(1, c_p)


def bn_apply(x, scale, shift, *, relu, out_dtype):
    M_p, C_p = x.shape
    tm = 256 if M_p % 256 == 0 else M_p
    tn = _pick_tile(C_p, (512, 256, 128))
    kernel = functools.partial(_bn_apply_kernel, relu=relu)
    return pl.pallas_call(
        kernel,
        out_shape=jax.ShapeDtypeStruct((M_p, C_p), out_dtype),
        grid=(M_p // tm, C_p // tn),
        in_specs=[pl.BlockSpec((tm, tn), lambda i, j: (i, j)),
                  pl.BlockSpec((1, tn), lambda i, j: (0, j)),
                  pl.BlockSpec((1, tn), lambda i, j: (0, j))],
        out_specs=pl.BlockSpec((tm, tn), lambda i, j: (i, j)),
        compiler_params=pltpu.CompilerParams(
            dimension_semantics=("parallel", "parallel"),
            vmem_limit_bytes=VMEM_LIMIT),
    )(x, scale, shift)


def bn_add_relu(x, r, sx, bx, sr, br):
    M_p, C_p = x.shape
    tm = 256 if M_p % 256 == 0 else M_p
    tn = _pick_tile(C_p, (512, 256, 128))
    return pl.pallas_call(
        _bn_add_relu_kernel,
        out_shape=jax.ShapeDtypeStruct((M_p, C_p), jnp.float32),
        grid=(M_p // tm, C_p // tn),
        in_specs=[pl.BlockSpec((tm, tn), lambda i, j: (i, j)),
                  pl.BlockSpec((tm, tn), lambda i, j: (i, j)),
                  pl.BlockSpec((1, tn), lambda i, j: (0, j)),
                  pl.BlockSpec((1, tn), lambda i, j: (0, j)),
                  pl.BlockSpec((1, tn), lambda i, j: (0, j)),
                  pl.BlockSpec((1, tn), lambda i, j: (0, j))],
        out_specs=pl.BlockSpec((tm, tn), lambda i, j: (i, j)),
        compiler_params=pltpu.CompilerParams(
            dimension_semantics=("parallel", "parallel"),
            vmem_limit_bytes=VMEM_LIMIT),
    )(x, r, sx, bx, sr, br)


# ----------------------------------------------------------------------------
# Glue: im2col patch extraction and weight packing (plain JAX)
# ----------------------------------------------------------------------------
def im2col_3d(x_ndhwc, ksize, stride, pad):
    """x: (N, D, H, W, C) -> ((N*Do*Ho*Wo, k^3*C), (N, Do, Ho, Wo))."""
    N, D, H, W, C = x_ndhwc.shape
    xp = jnp.pad(x_ndhwc, ((0, 0), (pad, pad), (pad, pad), (pad, pad), (0, 0)))
    Do = (D + 2 * pad - ksize) // stride + 1
    Ho = (H + 2 * pad - ksize) // stride + 1
    Wo = (W + 2 * pad - ksize) // stride + 1
    patches = []
    for kd in range(ksize):
        for kh in range(ksize):
            for kw in range(ksize):
                sl = jax.lax.slice(
                    xp,
                    (0, kd, kh, kw, 0),
                    (N, kd + stride * (Do - 1) + 1,
                     kh + stride * (Ho - 1) + 1,
                     kw + stride * (Wo - 1) + 1, C),
                    (1, stride, stride, stride, 1))
                patches.append(sl)
    patches = jnp.concatenate(patches, axis=-1)  # (N, Do, Ho, Wo, k^3*C)
    return patches.reshape(N * Do * Ho * Wo, ksize ** 3 * C), (N, Do, Ho, Wo)


def pack_conv_weight(w_oidhw):
    """PyTorch (Cout, Cin, kd, kh, kw) -> matmul weight (kd*kh*kw*Cin, Cout)."""
    Cout = w_oidhw.shape[0]
    return jnp.transpose(w_oidhw, (2, 3, 4, 1, 0)).reshape(-1, Cout)


# ----------------------------------------------------------------------------
# Full block forward (PyTorch-equivalent semantics, train-mode BN)
# ----------------------------------------------------------------------------
def c3d_basic_block(x_ncdhw, params, stride):
    inplanes = x_ncdhw.shape[1]
    planes = params["conv1_w"].shape[0]

    # NCDHW -> NDHWC, bf16 at the MXU boundary (kernels accumulate in f32).
    x = jnp.transpose(x_ncdhw, (0, 2, 3, 4, 1)).astype(jnp.bfloat16)

    # conv1 (3x3x3, stride=s, pad=1) + bn1(train) + relu
    a1, (N, Do, Ho, Wo) = im2col_3d(x, 3, stride, 1)
    M = a1.shape[0]                      # N*Do*Ho*Wo, common to all branches
    o1_raw, st1 = conv_matmul_stats(a1, pack_conv_weight(params["conv1_w"]))
    s1, b1 = finalize_bn(st1, M, params["bn1_gamma"], params["bn1_beta"])
    h1 = bn_apply(o1_raw, s1, b1, relu=True, out_dtype=jnp.bfloat16)
    h1 = h1[:M, :planes].reshape(N, Do, Ho, Wo, planes)

    # conv2 (3x3x3, stride=1, pad=1) + bn2(train)  [apply is fused below]
    a2, _ = im2col_3d(h1, 3, 1, 1)
    o2_raw, st2 = conv_matmul_stats(a2, pack_conv_weight(params["conv2_w"]))
    s2, b2 = finalize_bn(st2, M, params["bn2_gamma"], params["bn2_beta"])

    # downsample: 1x1x1 conv stride=s + bn(train)  [apply is fused below]
    xs = x[:, ::stride, ::stride, ::stride, :].reshape(M, inplanes)
    wd = params["ds_w"].reshape(planes, inplanes).T          # (Cin, Cout)
    od_raw, std_ = conv_matmul_stats(xs, wd)
    sd, bd = finalize_bn(std_, M, params["ds_gamma"], params["ds_beta"])

    # fused: bn2-apply + downsample-bn-apply + residual add + relu
    out = bn_add_relu(o2_raw, od_raw, s2, b2, sd, bd)
    out = out[:M, :planes].reshape(N, Do, Ho, Wo, planes)
    return jnp.transpose(out, (0, 4, 1, 2, 3)).astype(jnp.float32)


# ----------------------------------------------------------------------------
# Pure-JAX reference (for a correctness sanity check)
# ----------------------------------------------------------------------------
def _ref_conv3d(x, w, stride, pad):
    return jax.lax.conv_general_dilated(
        x, w, window_strides=(stride,) * 3, padding=[(pad, pad)] * 3,
        dimension_numbers=("NCDHW", "OIDHW", "NCDHW"),
        precision=jax.lax.Precision.HIGHEST)


def _ref_bn_train(x, gamma, beta, eps=BN_EPS):
    mean = x.mean(axis=(0, 2, 3, 4), keepdims=True)
    var = ((x - mean) ** 2).mean(axis=(0, 2, 3, 4), keepdims=True)
    g = gamma.reshape(1, -1, 1, 1, 1)
    b = beta.reshape(1, -1, 1, 1, 1)
    return (x - mean) / jnp.sqrt(var + eps) * g + b


def c3d_basic_block_ref(x, params, stride):
    out = _ref_conv3d(x, params["conv1_w"], stride, 1)
    out = _ref_bn_train(out, params["bn1_gamma"], params["bn1_beta"])
    out = jnp.maximum(out, 0.0)
    out = _ref_conv3d(out, params["conv2_w"], 1, 1)
    out = _ref_bn_train(out, params["bn2_gamma"], params["bn2_beta"])
    res = _ref_conv3d(x, params["ds_w"], stride, 0)
    res = _ref_bn_train(res, params["ds_gamma"], params["ds_beta"])
    return jnp.maximum(out + res, 0.0)


# ----------------------------------------------------------------------------
def make_params(key, inplanes, planes):
    ks = jax.random.split(key, 8)
    return {
        "conv1_w": 0.1 * jax.random.normal(ks[0], (planes, inplanes, 3, 3, 3),
                                           jnp.float32),
        "bn1_gamma": 1.0 + 0.1 * jax.random.normal(ks[1], (planes,), jnp.float32),
        "bn1_beta": 0.1 * jax.random.normal(ks[2], (planes,), jnp.float32),
        "conv2_w": 0.1 * jax.random.normal(ks[3], (planes, planes, 3, 3, 3),
                                           jnp.float32),
        "bn2_gamma": 1.0 + 0.1 * jax.random.normal(ks[4], (planes,), jnp.float32),
        "bn2_beta": 0.1 * jax.random.normal(ks[5], (planes,), jnp.float32),
        "ds_w": 0.1 * jax.random.normal(ks[6], (planes, inplanes, 1, 1, 1),
                                        jnp.float32),
        "ds_gamma": 1.0 + 0.1 * jax.random.normal(ks[7], (planes,), jnp.float32),
        "ds_beta": jnp.zeros((planes,), jnp.float32),
    }


if __name__ == "__main__":
    # Small shapes: batch=2, inplanes=4, planes=8, D=H=W=8, stride=2
    key = jax.random.PRNGKey(0)
    k_x, k_p = jax.random.split(key)
    batch, inplanes, planes, spatial, stride = 2, 4, 8, 8, 2

    x = jax.random.normal(k_x, (batch, inplanes, spatial, spatial, spatial),
                          jnp.float32)
    params = make_params(k_p, inplanes, planes)

    fwd = jax.jit(c3d_basic_block, static_argnames="stride")
    out = jax.block_until_ready(fwd(x, params, stride=stride))

    ref = jax.block_until_ready(c3d_basic_block_ref(x, params, stride))
    np.testing.assert_allclose(np.asarray(out), np.asarray(ref),
                               rtol=2e-2, atol=2e-2)

    print("KERNEL_OK")
</pallas_src>

<mosaic_0001>
module attributes {stable_mosaic.version = 11 : i64} {
  func.func @_matmul_stats_kernel(%arg0: i32, %arg1: i32, %arg2: i32, %arg3: memref<128x128xbf16, #tpu.memory_space<vmem>>, %arg4: memref<128x128xbf16, #tpu.memory_space<vmem>>, %arg5: memref<128x128xf32, #tpu.memory_space<vmem>>, %arg6: memref<8x128xf32, #tpu.memory_space<vmem>>, %arg7: memref<128x128xf32, #tpu.memory_space<vmem>>) attributes {dimension_semantics = [#tpu.dimension_semantics<parallel>, #tpu.dimension_semantics<arbitrary>, #tpu.dimension_semantics<arbitrary>], iteration_bounds = array<i64: 1, 1, 1>, scalar_prefetch = 0 : i64, scratch_operands = 1 : i64, tpu.core_type = #tpu.core_type<tc>, window_params = [{transform_indices = @transform_0, window_bounds = array<i64: 128, 128>}, {transform_indices = @transform_1, window_bounds = array<i64: 128, 128>}, {transform_indices = @transform_2, window_bounds = array<i64: 128, 128>}, {transform_indices = @transform_3, window_bounds = array<i64: 8, 128>}]} {
    %c0_i32 = arith.constant 0 : i32
    %0 = arith.cmpi eq, %arg2, %c0_i32 : i32
    %1 = arith.extui %0 : i1 to i32
    %c0_i32_0 = arith.constant 0 : i32
    %2 = arith.cmpi ne, %1, %c0_i32_0 : i32
    scf.if %2 {
      %cst_13 = arith.constant 0.000000e+00 : f32
      %17 = vector.broadcast %cst_13 : f32 to vector<128x128xf32>
      %c0_14 = arith.constant 0 : index
      %c0_15 = arith.constant 0 : index
      %18 = vector.load %arg7[%c0_14, %c0_15] : memref<128x128xf32, #tpu.memory_space<vmem>>, vector<128x128xf32>
      tpu.vector_store %arg7[%c0_14, %c0_15], %17 {strides = array<i32>} : memref<128x128xf32, #tpu.memory_space<vmem>>, vector<128x128xf32>,
    } else {
    }
    %c0_i32_1 = arith.constant 0 : i32
    %3 = arith.cmpi eq, %arg1, %c0_i32_1 : i32
    %c0_i32_2 = arith.constant 0 : i32
    %4 = arith.cmpi eq, %arg2, %c0_i32_2 : i32
    %5 = arith.andi %3, %4 : i1
    %6 = arith.extui %5 : i1 to i32
    %c0_i32_3 = arith.constant 0 : i32
    %7 = arith.cmpi ne, %6, %c0_i32_3 : i32
    scf.if %7 {
      %cst_13 = arith.constant 0.000000e+00 : f32
      %17 = vector.broadcast %cst_13 : f32 to vector<8x128xf32>
      %c0_14 = arith.constant 0 : index
      %c0_15 = arith.constant 0 : index
      %18 = vector.load %arg6[%c0_14, %c0_15] : memref<8x128xf32, #tpu.memory_space<vmem>>, vector<8x128xf32>
      tpu.vector_store %arg6[%c0_14, %c0_15], %17 {strides = array<i32>} : memref<8x128xf32, #tpu.memory_space<vmem>>, vector<8x128xf32>,
    } else {
    }
    %c0 = arith.constant 0 : index
    %c0_4 = arith.constant 0 : index
    %8 = vector.load %arg7[%c0, %c0_4] : memref<128x128xf32, #tpu.memory_space<vmem>>, vector<128x128xf32>
    %c0_5 = arith.constant 0 : index
    %c0_6 = arith.constant 0 : index
    %9 = vector.load %arg3[%c0_5, %c0_6] : memref<128x128xbf16, #tpu.memory_space<vmem>>, vector<128x128xbf16>
    %c0_7 = arith.constant 0 : index
    %c0_8 = arith.constant 0 : index
    %10 = vector.load %arg4[%c0_7, %c0_8] : memref<128x128xbf16, #tpu.memory_space<vmem>>, vector<128x128xbf16>
    %cst = arith.constant dense<0.000000e+00> : vector<128x128xf32>
    %11 = tpu.matmul %9, %10, %cst {dimension_numbers = #tpu.dot_dimension_numbers<[1], [0], [0], [1], [0, 0, 1, 1], [], []>} : vector<128x128xbf16>, vector<128x128xbf16>, vector<128x128xf32> -> vector<128x128xf32>
    %12 = arith.addf %8, %11 : vector<128x128xf32>
    %c0_9 = arith.constant 0 : index
    %c0_10 = arith.constant 0 : index
    %13 = vector.load %arg7[%c0_9, %c0_10] : memref<128x128xf32, #tpu.memory_space<vmem>>, vector<128x128xf32>
    tpu.vector_store %arg7[%c0_9, %c0_10], %12 {strides = array<i32>} : memref<128x128xf32, #tpu.memory_space<vmem>>, vector<128x128xf32>,
    %c0_i32_11 = arith.constant 0 : i32
    %14 = arith.cmpi eq, %arg2, %c0_i32_11 : i32
    %15 = arith.extui %14 : i1 to i32
    %c0_i32_12 = arith.constant 0 : i32
    %16 = arith.cmpi ne, %15, %c0_i32_12 : i32
    scf.if %16 {
      %c0_13 = arith.constant 0 : index
      %c0_14 = arith.constant 0 : index
      %17 = vector.load %arg7[%c0_13, %c0_14] : memref<128x128xf32, #tpu.memory_space<vmem>>, vector<128x128xf32>
      %c0_15 = arith.constant 0 : index
      %c0_16 = arith.constant 0 : index
      %18 = vector.load %arg5[%c0_15, %c0_16] : memref<128x128xf32, #tpu.memory_space<vmem>>, vector<128x128xf32>
      tpu.vector_store %arg5[%c0_15, %c0_16], %17 {strides = array<i32>} : memref<128x128xf32, #tpu.memory_space<vmem>>, vector<128x128xf32>,
      %cst_17 = arith.constant dense<0.000000e+00> : vector<128xf32>
      %19 = vector.multi_reduction <add>, %17, %cst_17 [0] : vector<128x128xf32> to vector<128xf32>
      %20 = vector.shape_cast %19 : vector<128xf32> to vector<1x128xf32>
      %21 = arith.mulf %17, %17 : vector<128x128xf32>
      %cst_18 = arith.constant dense<0.000000e+00> : vector<128xf32>
      %22 = vector.multi_reduction <add>, %21, %cst_18 [0] : vector<128x128xf32> to vector<128xf32>
      %23 = vector.shape_cast %22 : vector<128xf32> to vector<1x128xf32>
      %24 = tpu.iota {dimensions = array<i32: 0>} : vector<8x128xi32>
      %c0_19 = arith.constant 0 : index
      %c0_20 = arith.constant 0 : index
      %25 = vector.load %arg6[%c0_19, %c0_20] : memref<8x128xf32, #tpu.memory_space<vmem>>, vector<8x128xf32>
      %c0_i32_21 = arith.constant 0 : i32
      %26 = vector.broadcast %c0_i32_21 : i32 to vector<8x128xi32>
      %27 = arith.cmpi eq, %24, %26 : vector<8x128xi32>
      %c1_i32 = arith.constant 1 : i32
      %28 = vector.broadcast %c1_i32 : i32 to vector<8x128xi32>
      %29 = arith.cmpi eq, %24, %28 : vector<8x128xi32>
      %cst_22 = arith.constant 0.000000e+00 : f32
      %30 = vector.shape_cast %23 : vector<1x128xf32> to vector<1x128xf32>
      %31 = vector.broadcast %30 : vector<1x128xf32> to vector<8x128xf32>
      %32 = vector.broadcast %cst_22 : f32 to vector<8x128xf32>
      %33 = arith.select %29, %31, %32 : vector<8x128xi1>, vector<8x128xf32>
      %34 = vector.shape_cast %20 : vector<1x128xf32> to vector<1x128xf32>
      %35 = vector.broadcast %34 : vector<1x128xf32> to vector<8x128xf32>
      %36 = arith.select %27, %35, %33 : vector<8x128xi1>, vector<8x128xf32>
      %37 = arith.addf %25, %36 : vector<8x128xf32>
      %c0_23 = arith.constant 0 : index
      %c0_24 = arith.constant 0 : index
      %38 = vector.load %arg6[%c0_23, %c0_24] : memref<8x128xf32, #tpu.memory_space<vmem>>, vector<8x128xf32>
      tpu.vector_store %arg6[%c0_23, %c0_24], %37 {strides = array<i32>} : memref<8x128xf32, #tpu.memory_space<vmem>>, vector<8x128xf32>,
    } else {
    }
    return
  }
  func.func @transform_0(%arg0: i32, %arg1: i32, %arg2: i32) -> (i32, i32) {
    %c0_i32 = arith.constant 0 : i32
    return %arg1, %arg2 : i32, i32
  }
  func.func @transform_1(%arg0: i32, %arg1: i32, %arg2: i32) -> (i32, i32) {
    %c0_i32 = arith.constant 0 : i32
    return %arg2, %arg0 : i32, i32
  }
  func.func @transform_2(%arg0: i32, %arg1: i32, %arg2: i32) -> (i32, i32) {
    %c0_i32 = arith.constant 0 : i32
    return %arg1, %arg0 : i32, i32
  }
  func.func @transform_3(%arg0: i32, %arg1: i32, %arg2: i32) -> (i32, i32) {
    %c0_i32 = arith.constant 0 : i32
    %c0_i32_0 = arith.constant 0 : i32
    return %c0_i32, %arg0 : i32, i32
  }
}

module attributes {stable_mosaic.version = 11 : i64} {
  func.func @_bn_apply_kernel(%arg0: i32, %arg1: i32, %arg2: memref<128x128xf32, #tpu.memory_space<vmem>>, %arg3: memref<1x128xf32, #tpu.memory_space<vmem>>, %arg4: memref<1x128xf32, #tpu.memory_space<vmem>>, %arg5: memref<128x128xbf16, #tpu.memory_space<vmem>>) attributes {dimension_semantics = [#tpu.dimension_semantics<parallel>, #tpu.dimension_semantics<parallel>], iteration_bounds = array<i64: 1, 1>, scalar_prefetch = 0 : i64, scratch_operands = 0 : i64, tpu.core_type = #tpu.core_type<tc>, window_params = [{transform_indices = @transform_0, window_bounds = array<i64: 128, 128>}, {transform_indices = @transform_1, window_bounds = array<i64: 1, 128>}, {transform_indices = @transform_2, window_bounds = array<i64: 1, 128>}, {transform_indices = @transform_3, window_bounds = array<i64: 128, 128>}]} {
    %c0 = arith.constant 0 : index
    %c0_0 = arith.constant 0 : index
    %0 = vector.load %arg2[%c0, %c0_0] : memref<128x128xf32, #tpu.memory_space<vmem>>, vector<128x128xf32>
    %c0_1 = arith.constant 0 : index
    %c0_2 = arith.constant 0 : index
    %1 = vector.load %arg3[%c0_1, %c0_2] : memref<1x128xf32, #tpu.memory_space<vmem>>, vector<1x128xf32>
    %2 = vector.broadcast %1 : vector<1x128xf32> to vector<128x128xf32>
    %3 = arith.mulf %0, %2 : vector<128x128xf32>
    %c0_3 = arith.constant 0 : index
    %c0_4 = arith.constant 0 : index
    %4 = vector.load %arg4[%c0_3, %c0_4] : memref<1x128xf32, #tpu.memory_space<vmem>>, vector<1x128xf32>
    %5 = vector.broadcast %4 : vector<1x128xf32> to vector<128x128xf32>
    %6 = arith.addf %3, %5 : vector<128x128xf32>
    %cst = arith.constant 0.000000e+00 : f32
    %7 = vector.broadcast %cst : f32 to vector<128x128xf32>
    %8 = arith.maximumf %6, %7 : vector<128x128xf32>
    %9 = arith.truncf %8 : vector<128x128xf32> to vector<128x128xbf16>
    %c0_5 = arith.constant 0 : index
    %c0_6 = arith.constant 0 : index
    %10 = vector.load %arg5[%c0_5, %c0_6] : memref<128x128xbf16, #tpu.memory_space<vmem>>, vector<128x128xbf16>
    tpu.vector_store %arg5[%c0_5, %c0_6], %9 {strides = array<i32>} : memref<128x128xbf16, #tpu.memory_space<vmem>>, vector<128x128xbf16>,
    return
  }
  func.func @transform_0(%arg0: i32, %arg1: i32) -> (i32, i32) {
    %c0_i32 = arith.constant 0 : i32
    return %arg0, %arg1 : i32, i32
  }
  func.func @transform_1(%arg0: i32, %arg1: i32) -> (i32, i32) {
    %c0_i32 = arith.constant 0 : i32
    %c0_i32_0 = arith.constant 0 : i32
    return %c0_i32, %arg1 : i32, i32
  }
  func.func @transform_2(%arg0: i32, %arg1: i32) -> (i32, i32) {
    %c0_i32 = arith.constant 0 : i32
    %c0_i32_0 = arith.constant 0 : i32
    return %c0_i32, %arg1 : i32, i32
  }
  func.func @transform_3(%arg0: i32, %arg1: i32) -> (i32, i32) {
    %c0_i32 = arith.constant 0 : i32
    return %arg0, %arg1 : i32, i32
  }
}

module attributes {stable_mosaic.version = 11 : i64} {
  func.func @_matmul_stats_kernel(%arg0: i32, %arg1: i32, %arg2: i32, %arg3: memref<128x256xbf16, #tpu.memory_space<vmem>>, %arg4: memref<256x128xbf16, #tpu.memory_space<vmem>>, %arg5: memref<128x128xf32, #tpu.memory_space<vmem>>, %arg6: memref<8x128xf32, #tpu.memory_space<vmem>>, %arg7: memref<128x128xf32, #tpu.memory_space<vmem>>) attributes {dimension_semantics = [#tpu.dimension_semantics<parallel>, #tpu.dimension_semantics<arbitrary>, #tpu.dimension_semantics<arbitrary>], iteration_bounds = array<i64: 1, 1, 1>, scalar_prefetch = 0 : i64, scratch_operands = 1 : i64, tpu.core_type = #tpu.core_type<tc>, window_params = [{transform_indices = @transform_0, window_bounds = array<i64: 128, 256>}, {transform_indices = @transform_1, window_bounds = array<i64: 256, 128>}, {transform_indices = @transform_2, window_bounds = array<i64: 128, 128>}, {transform_indices = @transform_3, window_bounds = array<i64: 8, 128>}]} {
    %c0_i32 = arith.constant 0 : i32
    %0 = arith.cmpi eq, %arg2, %c0_i32 : i32
    %1 = arith.extui %0 : i1 to i32
    %c0_i32_0 = arith.constant 0 : i32
    %2 = arith.cmpi ne, %1, %c0_i32_0 : i32
    scf.if %2 {
      %cst_13 = arith.constant 0.000000e+00 : f32
      %17 = vector.broadcast %cst_13 : f32 to vector<128x128xf32>
      %c0_14 = arith.constant 0 : index
      %c0_15 = arith.constant 0 : index
      %18 = vector.load %arg7[%c0_14, %c0_15] : memref<128x128xf32, #tpu.memory_space<vmem>>, vector<128x128xf32>
      tpu.vector_store %arg7[%c0_14, %c0_15], %17 {strides = array<i32>} : memref<128x128xf32, #tpu.memory_space<vmem>>, vector<128x128xf32>,
    } else {
    }
    %c0_i32_1 = arith.constant 0 : i32
    %3 = arith.cmpi eq, %arg1, %c0_i32_1 : i32
    %c0_i32_2 = arith.constant 0 : i32
    %4 = arith.cmpi eq, %arg2, %c0_i32_2 : i32
    %5 = arith.andi %3, %4 : i1
    %6 = arith.extui %5 : i1 to i32
    %c0_i32_3 = arith.constant 0 : i32
    %7 = arith.cmpi ne, %6, %c0_i32_3 : i32
    scf.if %7 {
      %cst_13 = arith.constant 0.000000e+00 : f32
      %17 = vector.broadcast %cst_13 : f32 to vector<8x128xf32>
      %c0_14 = arith.constant 0 : index
      %c0_15 = arith.constant 0 : index
      %18 = vector.load %arg6[%c0_14, %c0_15] : memref<8x128xf32, #tpu.memory_space<vmem>>, vector<8x128xf32>
      tpu.vector_store %arg6[%c0_14, %c0_15], %17 {strides = array<i32>} : memref<8x128xf32, #tpu.memory_space<vmem>>, vector<8x128xf32>,
    } else {
    }
    %c0 = arith.constant 0 : index
    %c0_4 = arith.constant 0 : index
    %8 = vector.load %arg7[%c0, %c0_4] : memref<128x128xf32, #tpu.memory_space<vmem>>, vector<128x128xf32>
    %c0_5 = arith.constant 0 : index
    %c0_6 = arith.constant 0 : index
    %9 = vector.load %arg3[%c0_5, %c0_6] : memref<128x256xbf16, #tpu.memory_space<vmem>>, vector<128x256xbf16>
    %c0_7 = arith.constant 0 : index
    %c0_8 = arith.constant 0 : index
    %10 = vector.load %arg4[%c0_7, %c0_8] : memref<256x128xbf16, #tpu.memory_space<vmem>>, vector<256x128xbf16>
    %cst = arith.constant dense<0.000000e+00> : vector<128x128xf32>
    %11 = tpu.matmul %9, %10, %cst {dimension_numbers = #tpu.dot_dimension_numbers<[1], [0], [0], [1], [0, 0, 1, 1], [], []>} : vector<128x256xbf16>, vector<256x128xbf16>, vector<128x128xf32> -> vector<128x128xf32>
    %12 = arith.addf %8, %11 : vector<128x128xf32>
    %c0_9 = arith.constant 0 : index
    %c0_10 = arith.constant 0 : index
    %13 = vector.load %arg7[%c0_9, %c0_10] : memref<128x128xf32, #tpu.memory_space<vmem>>, vector<128x128xf32>
    tpu.vector_store %arg7[%c0_9, %c0_10], %12 {strides = array<i32>} : memref<128x128xf32, #tpu.memory_space<vmem>>, vector<128x128xf32>,
    %c0_i32_11 = arith.constant 0 : i32
    %14 = arith.cmpi eq, %arg2, %c0_i32_11 : i32
    %15 = arith.extui %14 : i1 to i32
    %c0_i32_12 = arith.constant 0 : i32
    %16 = arith.cmpi ne, %15, %c0_i32_12 : i32
    scf.if %16 {
      %c0_13 = arith.constant 0 : index
      %c0_14 = arith.constant 0 : index
      %17 = vector.load %arg7[%c0_13, %c0_14] : memref<128x128xf32, #tpu.memory_space<vmem>>, vector<128x128xf32>
      %c0_15 = arith.constant 0 : index
      %c0_16 = arith.constant 0 : index
      %18 = vector.load %arg5[%c0_15, %c0_16] : memref<128x128xf32, #tpu.memory_space<vmem>>, vector<128x128xf32>
      tpu.vector_store %arg5[%c0_15, %c0_16], %17 {strides = array<i32>} : memref<128x128xf32, #tpu.memory_space<vmem>>, vector<128x128xf32>,
      %cst_17 = arith.constant dense<0.000000e+00> : vector<128xf32>
      %19 = vector.multi_reduction <add>, %17, %cst_17 [0] : vector<128x128xf32> to vector<128xf32>
      %20 = vector.shape_cast %19 : vector<128xf32> to vector<1x128xf32>
      %21 = arith.mulf %17, %17 : vector<128x128xf32>
      %cst_18 = arith.constant dense<0.000000e+00> : vector<128xf32>
      %22 = vector.multi_reduction <add>, %21, %cst_18 [0] : vector<128x128xf32> to vector<128xf32>
      %23 = vector.shape_cast %22 : vector<128xf32> to vector<1x128xf32>
      %24 = tpu.iota {dimensions = array<i32: 0>} : vector<8x128xi32>
      %c0_19 = arith.constant 0 : index
      %c0_20 = arith.constant 0 : index
      %25 = vector.load %arg6[%c0_19, %c0_20] : memref<8x128xf32, #tpu.memory_space<vmem>>, vector<8x128xf32>
      %c0_i32_21 = arith.constant 0 : i32
      %26 = vector.broadcast %c0_i32_21 : i32 to vector<8x128xi32>
      %27 = arith.cmpi eq, %24, %26 : vector<8x128xi32>
      %c1_i32 = arith.constant 1 : i32
      %28 = vector.broadcast %c1_i32 : i32 to vector<8x128xi32>
      %29 = arith.cmpi eq, %24, %28 : vector<8x128xi32>
      %cst_22 = arith.constant 0.000000e+00 : f32
      %30 = vector.shape_cast %23 : vector<1x128xf32> to vector<1x128xf32>
      %31 = vector.broadcast %30 : vector<1x128xf32> to vector<8x128xf32>
      %32 = vector.broadcast %cst_22 : f32 to vector<8x128xf32>
      %33 = arith.select %29, %31, %32 : vector<8x128xi1>, vector<8x128xf32>
      %34 = vector.shape_cast %20 : vector<1x128xf32> to vector<1x128xf32>
      %35 = vector.broadcast %34 : vector<1x128xf32> to vector<8x128xf32>
      %36 = arith.select %27, %35, %33 : vector<8x128xi1>, vector<8x128xf32>
      %37 = arith.addf %25, %36 : vector<8x128xf32>
      %c0_23 = arith.constant 0 : index
      %c0_24 = arith.constant 0 : index
      %38 = vector.load %arg6[%c0_23, %c0_24] : memref<8x128xf32, #tpu.memory_space<vmem>>, vector<8x128xf32>
      tpu.vector_store %arg6[%c0_23, %c0_24], %37 {strides = array<i32>} : memref<8x128xf32, #tpu.memory_space<vmem>>, vector<8x128xf32>,
    } else {
    }
    return
  }
  func.func @transform_0(%arg0: i32, %arg1: i32, %arg2: i32) -> (i32, i32) {
    %c0_i32 = arith.constant 0 : i32
    return %arg1, %arg2 : i32, i32
  }
  func.func @transform_1(%arg0: i32, %arg1: i32, %arg2: i32) -> (i32, i32) {
    %c0_i32 = arith.constant 0 : i32
    return %arg2, %arg0 : i32, i32
  }
  func.func @transform_2(%arg0: i32, %arg1: i32, %arg2: i32) -> (i32, i32) {
    %c0_i32 = arith.constant 0 : i32
    return %arg1, %arg0 : i32, i32
  }
  func.func @transform_3(%arg0: i32, %arg1: i32, %arg2: i32) -> (i32, i32) {
    %c0_i32 = arith.constant 0 : i32
    %c0_i32_0 = arith.constant 0 : i32
    return %c0_i32, %arg0 : i32, i32
  }
}

module attributes {stable_mosaic.version = 11 : i64} {
  func.func @_bn_add_relu_kernel(%arg0: i32, %arg1: i32, %arg2: memref<128x128xf32, #tpu.memory_space<vmem>>, %arg3: memref<128x128xf32, #tpu.memory_space<vmem>>, %arg4: memref<1x128xf32, #tpu.memory_space<vmem>>, %arg5: memref<1x128xf32, #tpu.memory_space<vmem>>, %arg6: memref<1x128xf32, #tpu.memory_space<vmem>>, %arg7: memref<1x128xf32, #tpu.memory_space<vmem>>, %arg8: memref<128x128xf32, #tpu.memory_space<vmem>>) attributes {dimension_semantics = [#tpu.dimension_semantics<parallel>, #tpu.dimension_semantics<parallel>], iteration_bounds = array<i64: 1, 1>, scalar_prefetch = 0 : i64, scratch_operands = 0 : i64, tpu.core_type = #tpu.core_type<tc>, window_params = [{transform_indices = @transform_0, window_bounds = array<i64: 128, 128>}, {transform_indices = @transform_1, window_bounds = array<i64: 128, 128>}, {transform_indices = @transform_2, window_bounds = array<i64: 1, 128>}, {transform_indices = @transform_3, window_bounds = array<i64: 1, 128>}, {transform_indices = @transform_4, window_bounds = array<i64: 1, 128>}, {transform_indices = @transform_5, window_bounds = array<i64: 1, 128>}, {transform_indices = @transform_6, window_bounds = array<i64: 128, 128>}]} {
    %c0 = arith.constant 0 : index
    %c0_0 = arith.constant 0 : index
    %0 = vector.load %arg2[%c0, %c0_0] : memref<128x128xf32, #tpu.memory_space<vmem>>, vector<128x128xf32>
    %c0_1 = arith.constant 0 : index
    %c0_2 = arith.constant 0 : index
    %1 = vector.load %arg4[%c0_1, %c0_2] : memref<1x128xf32, #tpu.memory_space<vmem>>, vector<1x128xf32>
    %2 = vector.broadcast %1 : vector<1x128xf32> to vector<128x128xf32>
    %3 = arith.mulf %0, %2 : vector<128x128xf32>
    %c0_3 = arith.constant 0 : index
    %c0_4 = arith.constant 0 : index
    %4 = vector.load %arg5[%c0_3, %c0_4] : memref<1x128xf32, #tpu.memory_space<vmem>>, vector<1x128xf32>
    %5 = vector.broadcast %4 : vector<1x128xf32> to vector<128x128xf32>
    %6 = arith.addf %3, %5 : vector<128x128xf32>
    %c0_5 = arith.constant 0 : index
    %c0_6 = arith.constant 0 : index
    %7 = vector.load %arg3[%c0_5, %c0_6] : memref<128x128xf32, #tpu.memory_space<vmem>>, vector<128x128xf32>
    %c0_7 = arith.constant 0 : index
    %c0_8 = arith.constant 0 : index
    %8 = vector.load %arg6[%c0_7, %c0_8] : memref<1x128xf32, #tpu.memory_space<vmem>>, vector<1x128xf32>
    %9 = vector.broadcast %8 : vector<1x128xf32> to vector<128x128xf32>
    %10 = arith.mulf %7, %9 : vector<128x128xf32>
    %11 = arith.addf %6, %10 : vector<128x128xf32>
    %c0_9 = arith.constant 0 : index
    %c0_10 = arith.constant 0 : index
    %12 = vector.load %arg7[%c0_9, %c0_10] : memref<1x128xf32, #tpu.memory_space<vmem>>, vector<1x128xf32>
    %13 = vector.broadcast %12 : vector<1x128xf32> to vector<128x128xf32>
    %14 = arith.addf %11, %13 : vector<128x128xf32>
    %cst = arith.constant 0.000000e+00 : f32
    %15 = vector.broadcast %cst : f32 to vector<128x128xf32>
    %16 = arith.maximumf %14, %15 : vector<128x128xf32>
    %c0_11 = arith.constant 0 : index
    %c0_12 = arith.constant 0 : index
    %17 = vector.load %arg8[%c0_11, %c0_12] : memref<128x128xf32, #tpu.memory_space<vmem>>, vector<128x128xf32>
    tpu.vector_store %arg8[%c0_11, %c0_12], %16 {strides = array<i32>} : memref<128x128xf32, #tpu.memory_space<vmem>>, vector<128x128xf32>,
    return
  }
  func.func @transform_0(%arg0: i32, %arg1: i32) -> (i32, i32) {
    %c0_i32 = arith.constant 0 : i32
    return %arg0, %arg1 : i32, i32
  }
  func.func @transform_1(%arg0: i32, %arg1: i32) -> (i32, i32) {
    %c0_i32 = arith.constant 0 : i32
    return %arg0, %arg1 : i32, i32
  }
  func.func @transform_2(%arg0: i32, %arg1: i32) -> (i32, i32) {
    %c0_i32 = arith.constant 0 : i32
    %c0_i32_0 = arith.constant 0 : i32
    return %c0_i32, %arg1 : i32, i32
  }
  func.func @transform_3(%arg0: i32, %arg1: i32) -> (i32, i32) {
    %c0_i32 = arith.constant 0 : i32
    %c0_i32_0 = arith.constant 0 : i32
    return %c0_i32, %arg1 : i32, i32
  }
  func.func @transform_4(%arg0: i32, %arg1: i32) -> (i32, i32) {
    %c0_i32 = arith.constant 0 : i32
    %c0_i32_0 = arith.constant 0 : i32
    return %c0_i32, %arg1 : i32, i32
  }
  func.func @transform_5(%arg0: i32, %arg1: i32) -> (i32, i32) {
    %c0_i32 = arith.constant 0 : i32
    %c0_i32_0 = arith.constant 0 : i32
    return %c0_i32, %arg1 : i32, i32
  }
  func.func @transform_6(%arg0: i32, %arg1: i32) -> (i32, i32) {
    %c0_i32 = arith.constant 0 : i32
    return %arg0, %arg1 : i32, i32
  }
}

</mosaic_0001>

<llo_original>
// kernel: c3d_basic_block.6
$region0: #{c3d_basic_block.6}
  #allocation0 [shape = 'u32[]', space=smem, size = 0x4, offset = 0x4, fixed_abs, tag = 'smem constant byte address 0x4 - core index']
  #allocation1 [shape = 'u32[144,128]{1,0:T(1,128)}', space=vmem, size = 0x12000, scoped, tag = 'internal scratch']
  %s0 = inlined_call_operand.vmem [shape: f32[128,128], index: 0, kind: input, shape index: {}]
  %s1 = inlined_call_operand.vmem [shape: f32[1,128], index: 1, kind: input, shape index: {}]
  %s2 = inlined_call_operand.vmem [shape: f32[1,128], index: 2, kind: input, shape index: {}]
  %s3 = inlined_call_operand.vmem [shape: bf16[128,128], index: 3, kind: output, shape index: {}]
  %s4 = sld [smem:[#allocation0]]
  $region22: #{c3d_basic_block.6} parent=0
    _
  %s6 = ssub.s32 1, %s4
  %s7 = scalar_select 0, %s6, %s4
  // Predicated region
  $region2: #{c3d_basic_block.6} parent=0 // pred_check
    _
  $region3: #{c3d_basic_block.6} parent=0 // pred_check_branch
    %9 = sbr.rel (0) target = $region5
  $region4: #{c3d_basic_block.6} parent=0 // pred_region
    _
  $region5: #{c3d_basic_block.6} parent=0 // pred_fallthru
    _
  // Predicated region
  $region6: #{c3d_basic_block.6} parent=0 // pred_check
    _
  $region7: #{c3d_basic_block.6} parent=0 // pred_check_branch
    %11 = sbr.rel (0) target = $region9
  $region8: #{c3d_basic_block.6} parent=0 // pred_region
    _
  $region9: #{c3d_basic_block.6} parent=0 // pred_fallthru
    _
  // Predicated region
  $region10: #{c3d_basic_block.6} parent=0 // pred_check
    _
  $region11: #{c3d_basic_block.6} parent=0 // pred_check_branch
    %13 = sbr.rel (0) target = $region13
  $region12: #{c3d_basic_block.6} parent=0 // pred_region
    _
  $region13: #{c3d_basic_block.6} parent=0 // pred_fallthru
    _
  %v14 = vld [vmem:[%s0] sm:$0xff]
  %v15 = vld [vmem:[%s0 + $0x8] sm:$0xff]
  %v16 = vld [vmem:[%s0 + $0x10] sm:$0xff]
  %v17 = vld [vmem:[%s0 + $0x18] sm:$0xff]
  %v18 = vld [vmem:[%s0 + $0x20] sm:$0xff]
  %v19 = vld [vmem:[%s0 + $0x28] sm:$0xff]
  %v20 = vld [vmem:[%s0 + $0x30] sm:$0xff]
  %v21 = vld [vmem:[%s0 + $0x38] sm:$0xff]
  %v22 = vld [vmem:[%s0 + $0x40] sm:$0xff]
  %v23 = vld [vmem:[%s0 + $0x48] sm:$0xff]
  %v24 = vld [vmem:[%s0 + $0x50] sm:$0xff]
  %v25 = vld [vmem:[%s0 + $0x58] sm:$0xff]
  %v26 = vld [vmem:[%s0 + $0x60] sm:$0xff]
  %v27 = vld [vmem:[%s0 + $0x68] sm:$0xff]
  %v28 = vld [vmem:[%s0 + $0x70] sm:$0xff]
  %v29 = vld [vmem:[%s0 + $0x78] sm:$0xff]
  %v30 = vld [vmem:[%s1] sm:$0x1]
  %v32 = vlaneseq
  %v33 = vshrl.u32 %v32, 7
  %v34 = vsub.s32 0, %v33
  %v35 = vrot.slane %v30, %v34
  %v37 = vmul.f32 %v14, %v35
  %v38 = vmul.f32 %v15, %v35
  %v39 = vmul.f32 %v16, %v35
  %v40 = vmul.f32 %v17, %v35
  %v41 = vmul.f32 %v18, %v35
  %v42 = vmul.f32 %v19, %v35
  %v43 = vmul.f32 %v20, %v35
  %v44 = vmul.f32 %v21, %v35
  %v45 = vmul.f32 %v22, %v35
  %v46 = vmul.f32 %v23, %v35
  %v47 = vmul.f32 %v24, %v35
  %v48 = vmul.f32 %v25, %v35
  %v49 = vmul.f32 %v26, %v35
  %v50 = vmul.f32 %v27, %v35
  %v51 = vmul.f32 %v28, %v35
  %v52 = vmul.f32 %v29, %v35
  %v53 = vld [vmem:[%s2] sm:$0x1]
  %v55 = vlaneseq
  %v56 = vshrl.u32 %v55, 7
  %v57 = vsub.s32 0, %v56
  %v58 = vrot.slane %v53, %v57
  %v60 = vadd.f32 %v37, %v58
  %v61 = vadd.f32 %v38, %v58
  %v62 = vadd.f32 %v39, %v58
  %v63 = vadd.f32 %v40, %v58
  %v64 = vadd.f32 %v41, %v58
  %v65 = vadd.f32 %v42, %v58
  %v66 = vadd.f32 %v43, %v58
  %v67 = vadd.f32 %v44, %v58
  %v68 = vadd.f32 %v45, %v58
  %v69 = vadd.f32 %v46, %v58
  %v70 = vadd.f32 %v47, %v58
  %v71 = vadd.f32 %v48, %v58
  %v72 = vadd.f32 %v49, %v58
  %v73 = vadd.f32 %v50, %v58
  %v74 = vadd.f32 %v51, %v58
  %v75 = vadd.f32 %v52, %v58
  %v76 = vmax.f32 %v60, 0.0
  %v77 = vmax.f32 %v61, 0.0
  %v78 = vmax.f32 %v62, 0.0
  %v79 = vmax.f32 %v63, 0.0
  %v80 = vmax.f32 %v64, 0.0
  %v81 = vmax.f32 %v65, 0.0
  %v82 = vmax.f32 %v66, 0.0
  %v83 = vmax.f32 %v67, 0.0
  %v84 = vmax.f32 %v68, 0.0
  %v85 = vmax.f32 %v69, 0.0
  %v86 = vmax.f32 %v70, 0.0
  %v87 = vmax.f32 %v71, 0.0
  %v88 = vmax.f32 %v72, 0.0
  %v89 = vmax.f32 %v73, 0.0
  %v90 = vmax.f32 %v74, 0.0
  %v91 = vmax.f32 %v75, 0.0
  %v92 = vpack.c.bf16 %v77, %v76
  %v93 = vpack.c.bf16 %v79, %v78
  %v94 = vpack.c.bf16 %v81, %v80
  %v95 = vpack.c.bf16 %v83, %v82
  %v96 = vpack.c.bf16 %v85, %v84
  %v97 = vpack.c.bf16 %v87, %v86
  %v98 = vpack.c.bf16 %v89, %v88
  %v99 = vpack.c.bf16 %v91, %v90
  %v108 = vunpack.c.l.b16 %v92
  %v109 = vunpack.c.h.b16 %v92
  %v110 = vunpack.c.l.b16 %v93
  %v111 = vunpack.c.h.b16 %v93
  %v112 = vunpack.c.l.b16 %v94
  %v113 = vunpack.c.h.b16 %v94
  %v114 = vunpack.c.l.b16 %v95
  %v115 = vunpack.c.h.b16 %v95
  %v116 = vunpack.c.l.b16 %v96
  %v117 = vunpack.c.h.b16 %v96
  %v118 = vunpack.c.l.b16 %v97
  %v119 = vunpack.c.h.b16 %v97
  %v120 = vunpack.c.l.b16 %v98
  %v121 = vunpack.c.h.b16 %v98
  %v122 = vunpack.c.l.b16 %v99
  %v123 = vunpack.c.h.b16 %v99
  %v124 = vpack.c.b16 %v108, %v108
  %v125 = vpack.c.b16 %v109, %v109
  %v126 = vpack.c.b16 %v110, %v110
  %v127 = vpack.c.b16 %v111, %v111
  %v128 = vpack.c.b16 %v112, %v112
  %v129 = vpack.c.b16 %v113, %v113
  %v130 = vpack.c.b16 %v114, %v114
  %v131 = vpack.c.b16 %v115, %v115
  %v132 = vpack.c.b16 %v116, %v116
  %v133 = vpack.c.b16 %v117, %v117
  %v134 = vpack.c.b16 %v118, %v118
  %v135 = vpack.c.b16 %v119, %v119
  %v136 = vpack.c.b16 %v120, %v120
  %v137 = vpack.c.b16 %v121, %v121
  %v138 = vpack.c.b16 %v122, %v122
  %v139 = vpack.c.b16 %v123, %v123
  %156 = vst [vmem:[%s3] sm:$0xf] %v124
  %157 = vst [vmem:[%s3 + $0x4] sm:$0xf] %v125
  %158 = vst [vmem:[%s3 + $0x8] sm:$0xf] %v126
  %159 = vst [vmem:[%s3 + $0xc] sm:$0xf] %v127
  %160 = vst [vmem:[%s3 + $0x10] sm:$0xf] %v128
  %161 = vst [vmem:[%s3 + $0x14] sm:$0xf] %v129
  %162 = vst [vmem:[%s3 + $0x18] sm:$0xf] %v130
  %163 = vst [vmem:[%s3 + $0x1c] sm:$0xf] %v131
  %164 = vst [vmem:[%s3 + $0x20] sm:$0xf] %v132
  %165 = vst [vmem:[%s3 + $0x24] sm:$0xf] %v133
  %166 = vst [vmem:[%s3 + $0x28] sm:$0xf] %v134
  %167 = vst [vmem:[%s3 + $0x2c] sm:$0xf] %v135
  %168 = vst [vmem:[%s3 + $0x30] sm:$0xf] %v136
  %169 = vst [vmem:[%s3 + $0x34] sm:$0xf] %v137
  %170 = vst [vmem:[%s3 + $0x38] sm:$0xf] %v138
  %171 = vst [vmem:[%s3 + $0x3c] sm:$0xf] %v139
  // Predicated region
  $region14: #{c3d_basic_block.6} parent=0 // pred_check
    _
  $region15: #{c3d_basic_block.6} parent=0 // pred_check_branch
    %173 = sbr.rel (0) target = $region17
  $region16: #{c3d_basic_block.6} parent=0 // pred_region
    _
  $region17: #{c3d_basic_block.6} parent=0 // pred_fallthru
    _
  // Predicated region
  $region18: #{c3d_basic_block.6} parent=0 // pred_check
    _
  $region19: #{c3d_basic_block.6} parent=0 // pred_check_branch
    %175 = sbr.rel (0) target = $region21
  $region20: #{c3d_basic_block.6} parent=0 // pred_region
    _
  $region21: #{c3d_basic_block.6} parent=0 // pred_fallthru
    _

// kernel: c3d_basic_block.5
$region0: #{c3d_basic_block.5}
  #allocation0 [shape = 'u32[]', space=smem, size = 0x4, offset = 0x4, fixed_abs, tag = 'smem constant byte address 0x4 - core index']
  #allocation1 [shape = 'u32[144,128]{1,0:T(1,128)}', space=vmem, size = 0x12000, scoped, tag = 'internal scratch']
  #allocation2 [shape = 'f32[128,128]{1,0:T(8,128)}', space=vmem, size = 0x10000, scoped, tag = 'scratch operand']
  %s0 = inlined_call_operand.vmem [shape: bf16[128,128], index: 0, kind: input, shape index: {}]
  %s1 = inlined_call_operand.vmem [shape: bf16[128,128], index: 1, kind: input, shape index: {}]
  %s2 = inlined_call_operand.vmem [shape: f32[128,128], index: 2, kind: output, shape index: {0}]
  %s3 = inlined_call_operand.vmem [shape: f32[8,128], index: 3, kind: output, shape index: {1}]
  %4 = xla_tuple %s2, %s3
  %s5 = sld [smem:[#allocation0]]
  $region38: #{c3d_basic_block.5} parent=0
    _
  %s7 = ssub.s32 1, %s5
  %s8 = scalar_select 0, %s7, %s5
  // Predicated region
  $region2: #{c3d_basic_block.5} parent=0 // pred_check
    _
  $region3: #{c3d_basic_block.5} parent=0 // pred_check_branch
    %10 = sbr.rel (0) target = $region5
  $region4: #{c3d_basic_block.5} parent=0 // pred_region
    _
  $region5: #{c3d_basic_block.5} parent=0 // pred_fallthru
    _
  // Predicated region
  $region6: #{c3d_basic_block.5} parent=0 // pred_check
    _
  $region7: #{c3d_basic_block.5} parent=0 // pred_check_branch
    %12 = sbr.rel (0) target = $region9
  $region8: #{c3d_basic_block.5} parent=0 // pred_region
    _
  $region9: #{c3d_basic_block.5} parent=0 // pred_fallthru
    _
  %p14 = scmp.eq.s32.totalorder 0, 0
  // Predicated region
  $region10: #{c3d_basic_block.5} parent=0 // pred_check
    %p15 = pneg %p14
  $region11: #{c3d_basic_block.5} parent=0 // pred_check_branch
    %17 = sbr.rel (%p15) target = $region13
  $region12: #{c3d_basic_block.5} parent=0 // pred_region
    %18 = vst [vmem:[#allocation2] sm:$0xff] 0.0
    %19 = vst [vmem:[#allocation2 + $0x8] sm:$0xff] 0.0
    %20 = vst [vmem:[#allocation2 + $0x10] sm:$0xff] 0.0
    %21 = vst [vmem:[#allocation2 + $0x18] sm:$0xff] 0.0
    %22 = vst [vmem:[#allocation2 + $0x20] sm:$0xff] 0.0
    %23 = vst [vmem:[#allocation2 + $0x28] sm:$0xff] 0.0
    %24 = vst [vmem:[#allocation2 + $0x30] sm:$0xff] 0.0
    %25 = vst [vmem:[#allocation2 + $0x38] sm:$0xff] 0.0
    %26 = vst [vmem:[#allocation2 + $0x40] sm:$0xff] 0.0
    %27 = vst [vmem:[#allocation2 + $0x48] sm:$0xff] 0.0
    %28 = vst [vmem:[#allocation2 + $0x50] sm:$0xff] 0.0
    %29 = vst [vmem:[#allocation2 + $0x58] sm:$0xff] 0.0
    %30 = vst [vmem:[#allocation2 + $0x60] sm:$0xff] 0.0
    %31 = vst [vmem:[#allocation2 + $0x68] sm:$0xff] 0.0
    %32 = vst [vmem:[#allocation2 + $0x70] sm:$0xff] 0.0
    %33 = vst [vmem:[#allocation2 + $0x78] sm:$0xff] 0.0
  $region13: #{c3d_basic_block.5} parent=0 // pred_fallthru
    _
  %p34 = scmp.eq.s32.totalorder 0, 0
  %p35 = pnand %p34, %p14
  %p36 = pneg %p35
  // Predicated region
  $region14: #{c3d_basic_block.5} parent=0 // pred_check
    _
  $region15: #{c3d_basic_block.5} parent=0 // pred_check_branch
    %38 = sbr.rel (%p35) target = $region17
  $region16: #{c3d_basic_block.5} parent=0 // pred_region
    %39 = vst [vmem:[%s3] sm:$0xff] 0.0
  $region17: #{c3d_basic_block.5} parent=0 // pred_fallthru
    _
  %v40 = vld [vmem:[#allocation2] sm:$0xff]
  %v41 = vld [vmem:[#allocation2 + $0x8] sm:$0xff]
  %v42 = vld [vmem:[#allocation2 + $0x10] sm:$0xff]
  %v43 = vld [vmem:[#allocation2 + $0x18] sm:$0xff]
  %v44 = vld [vmem:[#allocation2 + $0x20] sm:$0xff]
  %v45 = vld [vmem:[#allocation2 + $0x28] sm:$0xff]
  %v46 = vld [vmem:[#allocation2 + $0x30] sm:$0xff]
  %v47 = vld [vmem:[#allocation2 + $0x38] sm:$0xff]
  %v48 = vld [vmem:[#allocation2 + $0x40] sm:$0xff]
  %v49 = vld [vmem:[#allocation2 + $0x48] sm:$0xff]
  %v50 = vld [vmem:[#allocation2 + $0x50] sm:$0xff]
  %v51 = vld [vmem:[#allocation2 + $0x58] sm:$0xff]
  %v52 = vld [vmem:[#allocation2 + $0x60] sm:$0xff]
  %v53 = vld [vmem:[#allocation2 + $0x68] sm:$0xff]
  %v54 = vld [vmem:[#allocation2 + $0x70] sm:$0xff]
  %v55 = vld [vmem:[#allocation2 + $0x78] sm:$0xff]
  %v56 = vld [vmem:[%s0] sm:$0xf]
  %v57 = vld [vmem:[%s0 + $0x4] sm:$0xf]
  %v58 = vld [vmem:[%s0 + $0x8] sm:$0xf]
  %v59 = vld [vmem:[%s0 + $0xc] sm:$0xf]
  %v60 = vld [vmem:[%s0 + $0x10] sm:$0xf]
  %v61 = vld [vmem:[%s0 + $0x14] sm:$0xf]
  %v62 = vld [vmem:[%s0 + $0x18] sm:$0xf]
  %v63 = vld [vmem:[%s0 + $0x1c] sm:$0xf]
  %v64 = vld [vmem:[%s0 + $0x20] sm:$0xf]
  %v65 = vld [vmem:[%s0 + $0x24] sm:$0xf]
  %v66 = vld [vmem:[%s0 + $0x28] sm:$0xf]
  %v67 = vld [vmem:[%s0 + $0x2c] sm:$0xf]
  %v68 = vld [vmem:[%s0 + $0x30] sm:$0xf]
  %v69 = vld [vmem:[%s0 + $0x34] sm:$0xf]
  %v70 = vld [vmem:[%s0 + $0x38] sm:$0xf]
  %v71 = vld [vmem:[%s0 + $0x3c] sm:$0xf]
  %v72 = vld [vmem:[%s1] sm:$0xf]
  %v73 = vld [vmem:[%s1 + $0x4] sm:$0xf]
  %v74 = vld [vmem:[%s1 + $0x8] sm:$0xf]
  %v75 = vld [vmem:[%s1 + $0xc] sm:$0xf]
  %v76 = vld [vmem:[%s1 + $0x10] sm:$0xf]
  %v77 = vld [vmem:[%s1 + $0x14] sm:$0xf]
  %v78 = vld [vmem:[%s1 + $0x18] sm:$0xf]
  %v79 = vld [vmem:[%s1 + $0x1c] sm:$0xf]
  %v80 = vld [vmem:[%s1 + $0x20] sm:$0xf]
  %v81 = vld [vmem:[%s1 + $0x24] sm:$0xf]
  %v82 = vld [vmem:[%s1 + $0x28] sm:$0xf]
  %v83 = vld [vmem:[%s1 + $0x2c] sm:$0xf]
  %v84 = vld [vmem:[%s1 + $0x30] sm:$0xf]
  %v85 = vld [vmem:[%s1 + $0x34] sm:$0xf]
  %v86 = vld [vmem:[%s1 + $0x38] sm:$0xf]
  %v87 = vld [vmem:[%s1 + $0x3c] sm:$0xf]
  %v104 = vunpack.c.l.b16 %v56
  %v105 = vunpack.c.l.b16 %v57
  %v106 = vunpack.c.l.b16 %v58
  %v107 = vunpack.c.l.b16 %v59
  %v108 = vunpack.c.l.b16 %v60
  %v109 = vunpack.c.l.b16 %v61
  %v110 = vunpack.c.l.b16 %v62
  %v111 = vunpack.c.l.b16 %v63
  %v112 = vunpack.c.l.b16 %v64
  %v113 = vunpack.c.l.b16 %v65
  %v114 = vunpack.c.l.b16 %v66
  %v115 = vunpack.c.l.b16 %v67
  %v116 = vunpack.c.l.b16 %v68
  %v117 = vunpack.c.l.b16 %v69
  %v118 = vunpack.c.l.b16 %v70
  %v119 = vunpack.c.l.b16 %v71
  %v120 = vpack.c.b16 %v105, %v104
  %v121 = vpack.c.b16 %v107, %v106
  %v122 = vpack.c.b16 %v109, %v108
  %v123 = vpack.c.b16 %v111, %v110
  %v124 = vpack.c.b16 %v113, %v112
  %v125 = vpack.c.b16 %v115, %v114
  %v126 = vpack.c.b16 %v117, %v116
  %v127 = vpack.c.b16 %v119, %v118
  %v152 = vunpack.c.l.b16 %v72
  %v153 = vunpack.c.l.b16 %v73
  %v154 = vunpack.c.l.b16 %v74
  %v155 = vunpack.c.l.b16 %v75
  %v156 = vunpack.c.l.b16 %v76
  %v157 = vunpack.c.l.b16 %v77
  %v158 = vunpack.c.l.b16 %v78
  %v159 = vunpack.c.l.b16 %v79
  %v160 = vunpack.c.l.b16 %v80
  %v161 = vunpack.c.l.b16 %v81
  %v162 = vunpack.c.l.b16 %v82
  %v163 = vunpack.c.l.b16 %v83
  %v164 = vunpack.c.l.b16 %v84
  %v165 = vunpack.c.l.b16 %v85
  %v166 = vunpack.c.l.b16 %v86
  %v167 = vunpack.c.l.b16 %v87
  %v168 = vpack.c.b16 %v153, %v152
  %v169 = vpack.c.b16 %v155, %v154
  %v170 = vpack.c.b16 %v157, %v156
  %v171 = vpack.c.b16 %v159, %v158
  %v172 = vpack.c.b16 %v161, %v160
  %v173 = vpack.c.b16 %v163, %v162
  %v174 = vpack.c.b16 %v165, %v164
  %v175 = vpack.c.b16 %v167, %v166
  %184 = vmatprep.subr.bf16.mxu0 0
  %185 = vmatpush1.bf16.msra.mxu0 %v168
  %186 = vmatprep.subr.bf16.mxu0 0
  %187 = vmatpush1.bf16.msra.mxu0 %v169
  %188 = vmatprep.subr.bf16.mxu0 0
  %189 = vmatpush1.bf16.msra.mxu0 %v170
  %190 = vmatprep.subr.bf16.mxu0 0
  %191 = vmatpush1.bf16.msra.mxu0 %v171
  %192 = vmatprep.subr.bf16.mxu0 0
  %193 = vmatpush1.bf16.msra.mxu0 %v172
  %194 = vmatprep.subr.bf16.mxu0 0
  %195 = vmatpush1.bf16.msra.mxu0 %v173
  %196 = vmatprep.subr.bf16.mxu0 0
  %197 = vmatpush1.bf16.msra.mxu0 %v174
  %198 = vmatprep.subr.bf16.mxu0 0
  %199 = vmatpush1.bf16.msra.mxu0 %v175
  %200 = vmatprep.subr.bf16.mxu0 0
  %201 = vmatpush1.bf16.msra.mxu0 0
  %202 = vmatprep.subr.bf16.mxu0 0
  %203 = vmatpush1.bf16.msra.mxu0 0
  %204 = vmatprep.subr.bf16.mxu0 0
  %205 = vmatpush1.bf16.msra.mxu0 0
  %206 = vmatprep.subr.bf16.mxu0 0
  %207 = vmatpush1.bf16.msra.mxu0 0
  %208 = vmatprep.subr.bf16.mxu0 0
  %209 = vmatpush1.bf16.msra.mxu0 0
  %210 = vmatprep.subr.bf16.mxu0 0
  %211 = vmatpush1.bf16.msra.mxu0 0
  %212 = vmatprep.subr.bf16.mxu0 0
  %213 = vmatpush1.bf16.msra.mxu0 0
  %214 = vmatprep.subr.bf16.mxu0 0
  %215 = vmatpush1.bf16.msra.mxu0 0
  %216 = vmatprep.mubr.bf16.mxu0 0
  %217 = vmatmul.mubr.bf16.gmra.mrb[0].mxu0 %v120
  %v218 = vpop.f32.mrb[0].mxu0
  %v219 = vadd.f32 0.0, %v218
  %v220 = vpop.f32.mrb[0].mxu0
  %v221 = vpop.f32.mrb[0].mxu0
  %v222 = vadd.f32 0.0, %v221
  %v223 = vpop.f32.mrb[0].mxu0
  %224 = vmatprep.mubr.bf16.mxu0 0
  %225 = vmatmul.mubr.bf16.gmra.mrb[0].mxu0 %v121
  %v226 = vpop.f32.mrb[0].mxu0
  %v227 = vadd.f32 0.0, %v226
  %v228 = vpop.f32.mrb[0].mxu0
  %v229 = vpop.f32.mrb[0].mxu0
  %v230 = vadd.f32 0.0, %v229
  %v231 = vpop.f32.mrb[0].mxu0
  %232 = vmatprep.mubr.bf16.mxu0 0
  %233 = vmatmul.mubr.bf16.gmra.mrb[0].mxu0 %v122
  %v234 = vpop.f32.mrb[0].mxu0
  %v235 = vadd.f32 0.0, %v234
  %v236 = vpop.f32.mrb[0].mxu0
  %v237 = vpop.f32.mrb[0].mxu0
  %v238 = vadd.f32 0.0, %v237
  %v239 = vpop.f32.mrb[0].mxu0
  %240 = vmatprep.mubr.bf16.mxu0 0
  %241 = vmatmul.mubr.bf16.gmra.mrb[0].mxu0 %v123
  %v242 = vpop.f32.mrb[0].mxu0
  %v243 = vadd.f32 0.0, %v242
  %v244 = vpop.f32.mrb[0].mxu0
  %v245 = vpop.f32.mrb[0].mxu0
  %v246 = vadd.f32 0.0, %v245
  %v247 = vpop.f32.mrb[0].mxu0
  %248 = vmatprep.mubr.bf16.mxu0 0
  %249 = vmatmul.mubr.bf16.gmra.mrb[0].mxu0 %v124
  %v250 = vpop.f32.mrb[0].mxu0
  %v251 = vadd.f32 0.0, %v250
  %v252 = vpop.f32.mrb[0].mxu0
  %v253 = vpop.f32.mrb[0].mxu0
  %v254 = vadd.f32 0.0, %v253
  %v255 = vpop.f32.mrb[0].mxu0
  %256 = vmatprep.mubr.bf16.mxu0 0
  %257 = vmatmul.mubr.bf16.gmra.mrb[0].mxu0 %v125
  %v258 = vpop.f32.mrb[0].mxu0
  %v259 = vadd.f32 0.0, %v258
  %v260 = vpop.f32.mrb[0].mxu0
  %v261 = vpop.f32.mrb[0].mxu0
  %v262 = vadd.f32 0.0, %v261
  %v263 = vpop.f32.mrb[0].mxu0
  %264 = vmatprep.mubr.bf16.mxu0 0
  %265 = vmatmul.mubr.bf16.gmra.mrb[0].mxu0 %v126
  %v266 = vpop.f32.mrb[0].mxu0
  %v267 = vadd.f32 0.0, %v266
  %v268 = vpop.f32.mrb[0].mxu0
  %v269 = vpop.f32.mrb[0].mxu0
  %v270 = vadd.f32 0.0, %v269
  %v271 = vpop.f32.mrb[0].mxu0
  %272 = vmatprep.mubr.bf16.mxu0 0
  %273 = vmatmul.mubr.bf16.gmra.mrb[0].mxu0 %v127
  %v274 = vpop.f32.mrb[0].mxu0
  %v275 = vadd.f32 0.0, %v274
  %v276 = vpop.f32.mrb[0].mxu0
  %v277 = vpop.f32.mrb[0].mxu0
  %v278 = vadd.f32 0.0, %v277
  %v279 = vpop.f32.mrb[0].mxu0
  %280 = vdwg.mxu0
  %v281 = vadd.f32 %v40, %v219
  %v282 = vadd.f32 %v41, %v222
  %v283 = vadd.f32 %v42, %v227
  %v284 = vadd.f32 %v43, %v230
  %v285 = vadd.f32 %v44, %v235
  %v286 = vadd.f32 %v45, %v238
  %v287 = vadd.f32 %v46, %v243
  %v288 = vadd.f32 %v47, %v246
  %v289 = vadd.f32 %v48, %v251
  %v290 = vadd.f32 %v49, %v254
  %v291 = vadd.f32 %v50, %v259
  %v292 = vadd.f32 %v51, %v262
  %v293 = vadd.f32 %v52, %v267
  %v294 = vadd.f32 %v53, %v270
  %v295 = vadd.f32 %v54, %v275
  %v296 = vadd.f32 %v55, %v278
  %297 = vst [vmem:[#allocation2] sm:$0xff] %v281
  %298 = vst [vmem:[#allocation2 + $0x8] sm:$0xff] %v282
  %299 = vst [vmem:[#allocation2 + $0x10] sm:$0xff] %v283
  %300 = vst [vmem:[#allocation2 + $0x18] sm:$0xff] %v284
  %301 = vst [vmem:[#allocation2 + $0x20] sm:$0xff] %v285
  %302 = vst [vmem:[#allocation2 + $0x28] sm:$0xff] %v286
  %303 = vst [vmem:[#allocation2 + $0x30] sm:$0xff] %v287
  %304 = vst [vmem:[#allocation2 + $0x38] sm:$0xff] %v288
  %305 = vst [vmem:[#allocation2 + $0x40] sm:$0xff] %v289
  %306 = vst [vmem:[#allocation2 + $0x48] sm:$0xff] %v290
  %307 = vst [vmem:[#allocation2 + $0x50] sm:$0xff] %v291
  %308 = vst [vmem:[#allocation2 + $0x58] sm:$0xff] %v292
  %309 = vst [vmem:[#allocation2 + $0x60] sm:$0xff] %v293
  %310 = vst [vmem:[#allocation2 + $0x68] sm:$0xff] %v294
  %311 = vst [vmem:[#allocation2 + $0x70] sm:$0xff] %v295
  %312 = vst [vmem:[#allocation2 + $0x78] sm:$0xff] %v296
  // Predicated region
  $region18: #{c3d_basic_block.5} parent=0 // pred_check
    %p313 = pneg %p14
  $region19: #{c3d_basic_block.5} parent=0 // pred_check_branch
    %315 = sbr.rel (%p313) target = $region21
  $region20: #{c3d_basic_block.5} parent=0 // pred_region
    %v316 = vld [vmem:[#allocation2] sm:$0xff]
    %v317 = vld [vmem:[#allocation2 + $0x8] sm:$0xff]
    %v318 = vld [vmem:[#allocation2 + $0x10] sm:$0xff]
    %v319 = vld [vmem:[#allocation2 + $0x18] sm:$0xff]
    %v320 = vld [vmem:[#allocation2 + $0x20] sm:$0xff]
    %v321 = vld [vmem:[#allocation2 + $0x28] sm:$0xff]
    %v322 = vld [vmem:[#allocation2 + $0x30] sm:$0xff]
    %v323 = vld [vmem:[#allocation2 + $0x38] sm:$0xff]
    %v324 = vld [vmem:[#allocation2 + $0x40] sm:$0xff]
    %v325 = vld [vmem:[#allocation2 + $0x48] sm:$0xff]
    %v326 = vld [vmem:[#allocation2 + $0x50] sm:$0xff]
    %v327 = vld [vmem:[#allocation2 + $0x58] sm:$0xff]
    %v328 = vld [vmem:[#allocation2 + $0x60] sm:$0xff]
    %v329 = vld [vmem:[#allocation2 + $0x68] sm:$0xff]
    %v330 = vld [vmem:[#allocation2 + $0x70] sm:$0xff]
    %v331 = vld [vmem:[#allocation2 + $0x78] sm:$0xff]
    %332 = vst [vmem:[%s2] sm:$0xff] %v316
    %333 = vst [vmem:[%s2 + $0x8] sm:$0xff] %v317
    %334 = vst [vmem:[%s2 + $0x10] sm:$0xff] %v318
    %335 = vst [vmem:[%s2 + $0x18] sm:$0xff] %v319
    %336 = vst [vmem:[%s2 + $0x20] sm:$0xff] %v320
    %337 = vst [vmem:[%s2 + $0x28] sm:$0xff] %v321
    %338 = vst [vmem:[%s2 + $0x30] sm:$0xff] %v322
    %339 = vst [vmem:[%s2 + $0x38] sm:$0xff] %v323
    %340 = vst [vmem:[%s2 + $0x40] sm:$0xff] %v324
    %341 = vst [vmem:[%s2 + $0x48] sm:$0xff] %v325
    %342 = vst [vmem:[%s2 + $0x50] sm:$0xff] %v326
    %343 = vst [vmem:[%s2 + $0x58] sm:$0xff] %v327
    %344 = vst [vmem:[%s2 + $0x60] sm:$0xff] %v328
    %345 = vst [vmem:[%s2 + $0x68] sm:$0xff] %v329
    %346 = vst [vmem:[%s2 + $0x70] sm:$0xff] %v330
    %347 = vst [vmem:[%s2 + $0x78] sm:$0xff] %v331
    %v348 = vadd.f32 %v316, %v317
    %v349 = vadd.f32 %v348, %v318
    %v350 = vadd.f32 %v349, %v319
    %v351 = vadd.f32 %v350, %v320
    %v352 = vadd.f32 %v351, %v321
    %v353 = vadd.f32 %v352, %v322
    %v354 = vadd.f32 %v353, %v323
    %v355 = vadd.f32 %v354, %v324
    %v356 = vadd.f32 %v355, %v325
    %v357 = vadd.f32 %v356, %v326
    %v358 = vadd.f32 %v357, %v327
    %v359 = vadd.f32 %v358, %v328
    %v360 = vadd.f32 %v359, %v329
    %v361 = vadd.f32 %v360, %v330
    %v362 = vadd.f32 %v361, %v331
    %v363 = vrot.slane %v362, 4
    %v364 = vadd.f32 %v362, %v363
    %v365 = vrot.slane %v364, 2
    %v366 = vadd.f32 %v364, %v365
    %v367 = vrot.slane %v366, 1
    %v368 = vadd.f32 %v366, %v367
    %v369 = vmul.f32 %v316, %v316
    %v370 = vmul.f32 %v317, %v317
    %v371 = vmul.f32 %v318, %v318
    %v372 = vmul.f32 %v319, %v319
    %v373 = vmul.f32 %v320, %v320
    %v374 = vmul.f32 %v321, %v321
    %v375 = vmul.f32 %v322, %v322
    %v376 = vmul.f32 %v323, %v323
    %v377 = vmul.f32 %v324, %v324
    %v378 = vmul.f32 %v325, %v325
    %v379 = vmul.f32 %v326, %v326
    %v380 = vmul.f32 %v327, %v327
    %v381 = vmul.f32 %v328, %v328
    %v382 = vmul.f32 %v329, %v329
    %v383 = vmul.f32 %v330, %v330
    %v384 = vmul.f32 %v331, %v331
    %v385 = vadd.f32 %v369, %v370
    %v386 = vadd.f32 %v385, %v371
    %v387 = vadd.f32 %v386, %v372
    %v388 = vadd.f32 %v387, %v373
    %v389 = vadd.f32 %v388, %v374
    %v390 = vadd.f32 %v389, %v375
    %v391 = vadd.f32 %v390, %v376
    %v392 = vadd.f32 %v391, %v377
    %v393 = vadd.f32 %v392, %v378
    %v394 = vadd.f32 %v393, %v379
    %v395 = vadd.f32 %v394, %v380
    %v396 = vadd.f32 %v395, %v381
    %v397 = vadd.f32 %v396, %v382
    %v398 = vadd.f32 %v397, %v383
    %v399 = vadd.f32 %v398, %v384
    %v400 = vrot.slane %v399, 4
    %v401 = vadd.f32 %v399, %v400
    %v402 = vrot.slane %v401, 2
    %v403 = vadd.f32 %v401, %v402
    %v404 = vrot.slane %v403, 1
    %v405 = vadd.f32 %v403, %v404
    %v406 = vlaneseq
    %v407 = vshrl.u32 %v406, 7
    %v408 = vld [vmem:[%s3] sm:$0xff]
    %vm409 = vcmp.eq.s32.totalorder %v407, 0
    %vm410 = vcmp.eq.s32.totalorder %v407, 1
    %v411 = vsel %vm410, %v405, 0.0
    %v412 = vsel %vm409, %v368, %v411
    %v413 = vadd.f32 %v408, %v412
    %414 = vst [vmem:[%s3] sm:$0xff] %v413
  $region21: #{c3d_basic_block.5} parent=0 // pred_fallthru
    _
  // Predicated region
  $region22: #{c3d_basic_block.5} parent=0 // pred_check
    _
  $region23: #{c3d_basic_block.5} parent=0 // pred_check_branch
    %416 = sbr.rel (0) target = $region25
  $region24: #{c3d_basic_block.5} parent=0 // pred_region
    _
  $region25: #{c3d_basic_block.5} parent=0 // pred_fallthru
    _
  // Predicated region
  $region26: #{c3d_basic_block.5} parent=0 // pred_check
    _
  $region27: #{c3d_basic_block.5} parent=0 // pred_check_branch
    %418 = sbr.rel (0) target = $region29
  $region28: #{c3d_basic_block.5} parent=0 // pred_region
    _
  $region29: #{c3d_basic_block.5} parent=0 // pred_fallthru
    _
  // Predicated region
  $region30: #{c3d_basic_block.5} parent=0 // pred_check
    _
  $region31: #{c3d_basic_block.5} parent=0 // pred_check_branch
    %420 = sbr.rel (0) target = $region33
  $region32: #{c3d_basic_block.5} parent=0 // pred_region
    _
  $region33: #{c3d_basic_block.5} parent=0 // pred_fallthru
    _
  // Predicated region
  $region34: #{c3d_basic_block.5} parent=0 // pred_check
    _
  $region35: #{c3d_basic_block.5} parent=0 // pred_check_branch
    %422 = sbr.rel (0) target = $region37
  $region36: #{c3d_basic_block.5} parent=0 // pred_region
    _
  $region37: #{c3d_basic_block.5} parent=0 // pred_fallthru
    _

// kernel: c3d_basic_block.7
$region0: #{c3d_basic_block.7}
  #allocation0 [shape = 'u32[]', space=smem, size = 0x4, offset = 0x4, fixed_abs, tag = 'smem constant byte address 0x4 - core index']
  #allocation1 [shape = 'u32[144,128]{1,0:T(1,128)}', space=vmem, size = 0x12000, scoped, tag = 'internal scratch']
  #allocation2 [shape = 'f32[128,128]{1,0:T(8,128)}', space=vmem, size = 0x10000, scoped, tag = 'scratch operand']
  %s0 = inlined_call_operand.vmem [shape: bf16[128,256], index: 0, kind: input, shape index: {}]
  %s1 = inlined_call_operand.vmem [shape: bf16[256,128], index: 1, kind: input, shape index: {}]
  %s2 = inlined_call_operand.vmem [shape: f32[128,128], index: 2, kind: output, shape index: {0}]
  %s3 = inlined_call_operand.vmem [shape: f32[8,128], index: 3, kind: output, shape index: {1}]
  %4 = xla_tuple %s2, %s3
  %s5 = sld [smem:[#allocation0]]
  $region38: #{c3d_basic_block.7} parent=0
    _
  %s7 = ssub.s32 1, %s5
  %s8 = scalar_select 0, %s7, %s5
  // Predicated region
  $region2: #{c3d_basic_block.7} parent=0 // pred_check
    _
  $region3: #{c3d_basic_block.7} parent=0 // pred_check_branch
    %10 = sbr.rel (0) target = $region5
  $region4: #{c3d_basic_block.7} parent=0 // pred_region
    _
  $region5: #{c3d_basic_block.7} parent=0 // pred_fallthru
    _
  // Predicated region
  $region6: #{c3d_basic_block.7} parent=0 // pred_check
    _
  $region7: #{c3d_basic_block.7} parent=0 // pred_check_branch
    %12 = sbr.rel (0) target = $region9
  $region8: #{c3d_basic_block.7} parent=0 // pred_region
    _
  $region9: #{c3d_basic_block.7} parent=0 // pred_fallthru
    _
  %p14 = scmp.eq.s32.totalorder 0, 0
  // Predicated region
  $region10: #{c3d_basic_block.7} parent=0 // pred_check
    %p15 = pneg %p14
  $region11: #{c3d_basic_block.7} parent=0 // pred_check_branch
    %17 = sbr.rel (%p15) target = $region13
  $region12: #{c3d_basic_block.7} parent=0 // pred_region
    %18 = vst [vmem:[#allocation2] sm:$0xff] 0.0
    %19 = vst [vmem:[#allocation2 + $0x8] sm:$0xff] 0.0
    %20 = vst [vmem:[#allocation2 + $0x10] sm:$0xff] 0.0
    %21 = vst [vmem:[#allocation2 + $0x18] sm:$0xff] 0.0
    %22 = vst [vmem:[#allocation2 + $0x20] sm:$0xff] 0.0
    %23 = vst [vmem:[#allocation2 + $0x28] sm:$0xff] 0.0
    %24 = vst [vmem:[#allocation2 + $0x30] sm:$0xff] 0.0
    %25 = vst [vmem:[#allocation2 + $0x38] sm:$0xff] 0.0
    %26 = vst [vmem:[#allocation2 + $0x40] sm:$0xff] 0.0
    %27 = vst [vmem:[#allocation2 + $0x48] sm:$0xff] 0.0
    %28 = vst [vmem:[#allocation2 + $0x50] sm:$0xff] 0.0
    %29 = vst [vmem:[#allocation2 + $0x58] sm:$0xff] 0.0
    %30 = vst [vmem:[#allocation2 + $0x60] sm:$0xff] 0.0
    %31 = vst [vmem:[#allocation2 + $0x68] sm:$0xff] 0.0
    %32 = vst [vmem:[#allocation2 + $0x70] sm:$0xff] 0.0
    %33 = vst [vmem:[#allocation2 + $0x78] sm:$0xff] 0.0
  $region13: #{c3d_basic_block.7} parent=0 // pred_fallthru
    _
  %p34 = scmp.eq.s32.totalorder 0, 0
  %p35 = pnand %p34, %p14
  %p36 = pneg %p35
  // Predicated region
  $region14: #{c3d_basic_block.7} parent=0 // pred_check
    _
  $region15: #{c3d_basic_block.7} parent=0 // pred_check_branch
    %38 = sbr.rel (%p35) target = $region17
  $region16: #{c3d_basic_block.7} parent=0 // pred_region
    %39 = vst [vmem:[%s3] sm:$0xff] 0.0
  $region17: #{c3d_basic_block.7} parent=0 // pred_fallthru
    _
  %v40 = vld [vmem:[#allocation2] sm:$0xff]
  %v41 = vld [vmem:[#allocation2 + $0x8] sm:$0xff]
  %v42 = vld [vmem:[#allocation2 + $0x10] sm:$0xff]
  %v43 = vld [vmem:[#allocation2 + $0x18] sm:$0xff]
  %v44 = vld [vmem:[#allocation2 + $0x20] sm:$0xff]
  %v45 = vld [vmem:[#allocation2 + $0x28] sm:$0xff]
  %v46 = vld [vmem:[#allocation2 + $0x30] sm:$0xff]
  %v47 = vld [vmem:[#allocation2 + $0x38] sm:$0xff]
  %v48 = vld [vmem:[#allocation2 + $0x40] sm:$0xff]
  %v49 = vld [vmem:[#allocation2 + $0x48] sm:$0xff]
  %v50 = vld [vmem:[#allocation2 + $0x50] sm:$0xff]
  %v51 = vld [vmem:[#allocation2 + $0x58] sm:$0xff]
  %v52 = vld [vmem:[#allocation2 + $0x60] sm:$0xff]
  %v53 = vld [vmem:[#allocation2 + $0x68] sm:$0xff]
  %v54 = vld [vmem:[#allocation2 + $0x70] sm:$0xff]
  %v55 = vld [vmem:[#allocation2 + $0x78] sm:$0xff]
  %v56 = vld [vmem:[%s0] sm:$0xff]
  %v57 = vld [vmem:[%s0 + $0x8] sm:$0xff]
  %v58 = vld [vmem:[%s0 + $0x10] sm:$0xff]
  %v59 = vld [vmem:[%s0 + $0x18] sm:$0xff]
  %v60 = vld [vmem:[%s0 + $0x20] sm:$0xff]
  %v61 = vld [vmem:[%s0 + $0x28] sm:$0xff]
  %v62 = vld [vmem:[%s0 + $0x30] sm:$0xff]
  %v63 = vld [vmem:[%s0 + $0x38] sm:$0xff]
  %v64 = vld [vmem:[%s0 + $0x40] sm:$0xff]
  %v65 = vld [vmem:[%s0 + $0x48] sm:$0xff]
  %v66 = vld [vmem:[%s0 + $0x50] sm:$0xff]
  %v67 = vld [vmem:[%s0 + $0x58] sm:$0xff]
  %v68 = vld [vmem:[%s0 + $0x60] sm:$0xff]
  %v69 = vld [vmem:[%s0 + $0x68] sm:$0xff]
  %v70 = vld [vmem:[%s0 + $0x70] sm:$0xff]
  %v71 = vld [vmem:[%s0 + $0x78] sm:$0xff]
  %v72 = vld [vmem:[%s1] sm:$0xf]
  %v73 = vld [vmem:[%s1 + $0x4] sm:$0xf]
  %v74 = vld [vmem:[%s1 + $0x8] sm:$0xf]
  %v75 = vld [vmem:[%s1 + $0xc] sm:$0xf]
  %v76 = vld [vmem:[%s1 + $0x10] sm:$0xf]
  %v77 = vld [vmem:[%s1 + $0x14] sm:$0xf]
  %v78 = vld [vmem:[%s1 + $0x18] sm:$0xf]
  %v79 = vld [vmem:[%s1 + $0x1c] sm:$0xf]
  %v80 = vld [vmem:[%s1 + $0x20] sm:$0xf]
  %v81 = vld [vmem:[%s1 + $0x24] sm:$0xf]
  %v82 = vld [vmem:[%s1 + $0x28] sm:$0xf]
  %v83 = vld [vmem:[%s1 + $0x2c] sm:$0xf]
  %v84 = vld [vmem:[%s1 + $0x30] sm:$0xf]
  %v85 = vld [vmem:[%s1 + $0x34] sm:$0xf]
  %v86 = vld [vmem:[%s1 + $0x38] sm:$0xf]
  %v87 = vld [vmem:[%s1 + $0x3c] sm:$0xf]
  %v88 = vld [vmem:[%s1 + $0x40] sm:$0xf]
  %v89 = vld [vmem:[%s1 + $0x44] sm:$0xf]
  %v90 = vld [vmem:[%s1 + $0x48] sm:$0xf]
  %v91 = vld [vmem:[%s1 + $0x4c] sm:$0xf]
  %v92 = vld [vmem:[%s1 + $0x50] sm:$0xf]
  %v93 = vld [vmem:[%s1 + $0x54] sm:$0xf]
  %v94 = vld [vmem:[%s1 + $0x58] sm:$0xf]
  %v95 = vld [vmem:[%s1 + $0x5c] sm:$0xf]
  %v96 = vld [vmem:[%s1 + $0x60] sm:$0xf]
  %v97 = vld [vmem:[%s1 + $0x64] sm:$0xf]
  %v98 = vld [vmem:[%s1 + $0x68] sm:$0xf]
  %v99 = vld [vmem:[%s1 + $0x6c] sm:$0xf]
  %v100 = vld [vmem:[%s1 + $0x70] sm:$0xf]
  %v101 = vld [vmem:[%s1 + $0x74] sm:$0xf]
  %v102 = vld [vmem:[%s1 + $0x78] sm:$0xf]
  %v103 = vld [vmem:[%s1 + $0x7c] sm:$0xf]
  %v120 = vunpack.c.l.b16 %v56
  %v121 = vunpack.c.h.b16 %v56
  %v122 = vunpack.c.l.b16 %v57
  %v123 = vunpack.c.h.b16 %v57
  %v124 = vunpack.c.l.b16 %v58
  %v125 = vunpack.c.h.b16 %v58
  %v126 = vunpack.c.l.b16 %v59
  %v127 = vunpack.c.h.b16 %v59
  %v128 = vunpack.c.l.b16 %v60
  %v129 = vunpack.c.h.b16 %v60
  %v130 = vunpack.c.l.b16 %v61
  %v131 = vunpack.c.h.b16 %v61
  %v132 = vunpack.c.l.b16 %v62
  %v133 = vunpack.c.h.b16 %v62
  %v134 = vunpack.c.l.b16 %v63
  %v135 = vunpack.c.h.b16 %v63
  %v136 = vunpack.c.l.b16 %v64
  %v137 = vunpack.c.h.b16 %v64
  %v138 = vunpack.c.l.b16 %v65
  %v139 = vunpack.c.h.b16 %v65
  %v140 = vunpack.c.l.b16 %v66
  %v141 = vunpack.c.h.b16 %v66
  %v142 = vunpack.c.l.b16 %v67
  %v143 = vunpack.c.h.b16 %v67
  %v144 = vunpack.c.l.b16 %v68
  %v145 = vunpack.c.h.b16 %v68
  %v146 = vunpack.c.l.b16 %v69
  %v147 = vunpack.c.h.b16 %v69
  %v148 = vunpack.c.l.b16 %v70
  %v149 = vunpack.c.h.b16 %v70
  %v150 = vunpack.c.l.b16 %v71
  %v151 = vunpack.c.h.b16 %v71
  %v152 = vpack.c.b16 %v122, %v120
  %v153 = vpack.c.b16 %v123, %v121
  %v154 = vpack.c.b16 %v126, %v124
  %v155 = vpack.c.b16 %v127, %v125
  %v156 = vpack.c.b16 %v130, %v128
  %v157 = vpack.c.b16 %v131, %v129
  %v158 = vpack.c.b16 %v134, %v132
  %v159 = vpack.c.b16 %v135, %v133
  %v160 = vpack.c.b16 %v138, %v136
  %v161 = vpack.c.b16 %v139, %v137
  %v162 = vpack.c.b16 %v142, %v140
  %v163 = vpack.c.b16 %v143, %v141
  %v164 = vpack.c.b16 %v146, %v144
  %v165 = vpack.c.b16 %v147, %v145
  %v166 = vpack.c.b16 %v150, %v148
  %v167 = vpack.c.b16 %v151, %v149
  %v216 = vunpack.c.l.b16 %v72
  %v217 = vunpack.c.l.b16 %v73
  %v218 = vunpack.c.l.b16 %v74
  %v219 = vunpack.c.l.b16 %v75
  %v220 = vunpack.c.l.b16 %v76
  %v221 = vunpack.c.l.b16 %v77
  %v222 = vunpack.c.l.b16 %v78
  %v223 = vunpack.c.l.b16 %v79
  %v224 = vunpack.c.l.b16 %v80
  %v225 = vunpack.c.l.b16 %v81
  %v226 = vunpack.c.l.b16 %v82
  %v227 = vunpack.c.l.b16 %v83
  %v228 = vunpack.c.l.b16 %v84
  %v229 = vunpack.c.l.b16 %v85
  %v230 = vunpack.c.l.b16 %v86
  %v231 = vunpack.c.l.b16 %v87
  %v232 = vunpack.c.l.b16 %v88
  %v233 = vunpack.c.l.b16 %v89
  %v234 = vunpack.c.l.b16 %v90
  %v235 = vunpack.c.l.b16 %v91
  %v236 = vunpack.c.l.b16 %v92
  %v237 = vunpack.c.l.b16 %v93
  %v238 = vunpack.c.l.b16 %v94
  %v239 = vunpack.c.l.b16 %v95
  %v240 = vunpack.c.l.b16 %v96
  %v241 = vunpack.c.l.b16 %v97
  %v242 = vunpack.c.l.b16 %v98
  %v243 = vunpack.c.l.b16 %v99
  %v244 = vunpack.c.l.b16 %v100
  %v245 = vunpack.c.l.b16 %v101
  %v246 = vunpack.c.l.b16 %v102
  %v247 = vunpack.c.l.b16 %v103
  %v248 = vpack.c.b16 %v217, %v216
  %v249 = vpack.c.b16 %v219, %v218
  %v250 = vpack.c.b16 %v221, %v220
  %v251 = vpack.c.b16 %v223, %v222
  %v252 = vpack.c.b16 %v225, %v224
  %v253 = vpack.c.b16 %v227, %v226
  %v254 = vpack.c.b16 %v229, %v228
  %v255 = vpack.c.b16 %v231, %v230
  %v256 = vpack.c.b16 %v233, %v232
  %v257 = vpack.c.b16 %v235, %v234
  %v258 = vpack.c.b16 %v237, %v236
  %v259 = vpack.c.b16 %v239, %v238
  %v260 = vpack.c.b16 %v241, %v240
  %v261 = vpack.c.b16 %v243, %v242
  %v262 = vpack.c.b16 %v245, %v244
  %v263 = vpack.c.b16 %v247, %v246
  %280 = vmatprep.subr.bf16.mxu0 0
  %281 = vmatpush1.bf16.msra.mxu0 %v248
  %282 = vmatprep.subr.bf16.mxu0 0
  %283 = vmatpush1.bf16.msra.mxu0 %v249
  %284 = vmatprep.subr.bf16.mxu0 0
  %285 = vmatpush1.bf16.msra.mxu0 %v250
  %286 = vmatprep.subr.bf16.mxu0 0
  %287 = vmatpush1.bf16.msra.mxu0 %v251
  %288 = vmatprep.subr.bf16.mxu0 0
  %289 = vmatpush1.bf16.msra.mxu0 %v252
  %290 = vmatprep.subr.bf16.mxu0 0
  %291 = vmatpush1.bf16.msra.mxu0 %v253
  %292 = vmatprep.subr.bf16.mxu0 0
  %293 = vmatpush1.bf16.msra.mxu0 %v254
  %294 = vmatprep.subr.bf16.mxu0 0
  %295 = vmatpush1.bf16.msra.mxu0 %v255
  %296 = vmatprep.subr.bf16.mxu0 0
  %297 = vmatpush1.bf16.msra.mxu0 %v256
  %298 = vmatprep.subr.bf16.mxu0 0
  %299 = vmatpush1.bf16.msra.mxu0 %v257
  %300 = vmatprep.subr.bf16.mxu0 0
  %301 = vmatpush1.bf16.msra.mxu0 %v258
  %302 = vmatprep.subr.bf16.mxu0 0
  %303 = vmatpush1.bf16.msra.mxu0 %v259
  %304 = vmatprep.subr.bf16.mxu0 0
  %305 = vmatpush1.bf16.msra.mxu0 %v260
  %306 = vmatprep.subr.bf16.mxu0 0
  %307 = vmatpush1.bf16.msra.mxu0 %v261
  %308 = vmatprep.subr.bf16.mxu0 0
  %309 = vmatpush1.bf16.msra.mxu0 %v262
  %310 = vmatprep.subr.bf16.mxu0 0
  %311 = vmatpush1.bf16.msra.mxu0 %v263
  %312 = vmatprep.mubr.bf16.mxu0 %v153
  %313 = vmatmul.mubr.bf16.gmra.mrb[0].mxu0 %v152
  %v314 = vpop.f32.mrb[0].mxu0
  %v315 = vadd.f32 0.0, %v314
  %v316 = vpop.f32.mrb[0].mxu0
  %v317 = vpop.f32.mrb[0].mxu0
  %v318 = vadd.f32 0.0, %v317
  %v319 = vpop.f32.mrb[0].mxu0
  %320 = vmatprep.mubr.bf16.mxu0 %v155
  %321 = vmatmul.mubr.bf16.gmra.mrb[0].mxu0 %v154
  %v322 = vpop.f32.mrb[0].mxu0
  %v323 = vadd.f32 0.0, %v322
  %v324 = vpop.f32.mrb[0].mxu0
  %v325 = vpop.f32.mrb[0].mxu0
  %v326 = vadd.f32 0.0, %v325
  %v327 = vpop.f32.mrb[0].mxu0
  %328 = vmatprep.mubr.bf16.mxu0 %v157
  %329 = vmatmul.mubr.bf16.gmra.mrb[0].mxu0 %v156
  %v330 = vpop.f32.mrb[0].mxu0
  %v331 = vadd.f32 0.0, %v330
  %v332 = vpop.f32.mrb[0].mxu0
  %v333 = vpop.f32.mrb[0].mxu0
  %v334 = vadd.f32 0.0, %v333
  %v335 = vpop.f32.mrb[0].mxu0
  %336 = vmatprep.mubr.bf16.mxu0 %v159
  %337 = vmatmul.mubr.bf16.gmra.mrb[0].mxu0 %v158
  %v338 = vpop.f32.mrb[0].mxu0
  %v339 = vadd.f32 0.0, %v338
  %v340 = vpop.f32.mrb[0].mxu0
  %v341 = vpop.f32.mrb[0].mxu0
  %v342 = vadd.f32 0.0, %v341
  %v343 = vpop.f32.mrb[0].mxu0
  %344 = vmatprep.mubr.bf16.mxu0 %v161
  %345 = vmatmul.mubr.bf16.gmra.mrb[0].mxu0 %v160
  %v346 = vpop.f32.mrb[0].mxu0
  %v347 = vadd.f32 0.0, %v346
  %v348 = vpop.f32.mrb[0].mxu0
  %v349 = vpop.f32.mrb[0].mxu0
  %v350 = vadd.f32 0.0, %v349
  %v351 = vpop.f32.mrb[0].mxu0
  %352 = vmatprep.mubr.bf16.mxu0 %v163
  %353 = vmatmul.mubr.bf16.gmra.mrb[0].mxu0 %v162
  %v354 = vpop.f32.mrb[0].mxu0
  %v355 = vadd.f32 0.0, %v354
  %v356 = vpop.f32.mrb[0].mxu0
  %v357 = vpop.f32.mrb[0].mxu0
  %v358 = vadd.f32 0.0, %v357
  %v359 = vpop.f32.mrb[0].mxu0
  %360 = vmatprep.mubr.bf16.mxu0 %v165
  %361 = vmatmul.mubr.bf16.gmra.mrb[0].mxu0 %v164
  %v362 = vpop.f32.mrb[0].mxu0
  %v363 = vadd.f32 0.0, %v362
  %v364 = vpop.f32.mrb[0].mxu0
  %v365 = vpop.f32.mrb[0].mxu0
  %v366 = vadd.f32 0.0, %v365
  %v367 = vpop.f32.mrb[0].mxu0
  %368 = vmatprep.mubr.bf16.mxu0 %v167
  %369 = vmatmul.mubr.bf16.gmra.mrb[0].mxu0 %v166
  %v370 = vpop.f32.mrb[0].mxu0
  %v371 = vadd.f32 0.0, %v370
  %v372 = vpop.f32.mrb[0].mxu0
  %v373 = vpop.f32.mrb[0].mxu0
  %v374 = vadd.f32 0.0, %v373
  %v375 = vpop.f32.mrb[0].mxu0
  %376 = vdwg.mxu0
  %v377 = vadd.f32 %v40, %v315
  %v378 = vadd.f32 %v41, %v318
  %v379 = vadd.f32 %v42, %v323
  %v380 = vadd.f32 %v43, %v326
  %v381 = vadd.f32 %v44, %v331
  %v382 = vadd.f32 %v45, %v334
  %v383 = vadd.f32 %v46, %v339
  %v384 = vadd.f32 %v47, %v342
  %v385 = vadd.f32 %v48, %v347
  %v386 = vadd.f32 %v49, %v350
  %v387 = vadd.f32 %v50, %v355
  %v388 = vadd.f32 %v51, %v358
  %v389 = vadd.f32 %v52, %v363
  %v390 = vadd.f32 %v53, %v366
  %v391 = vadd.f32 %v54, %v371
  %v392 = vadd.f32 %v55, %v374
  %393 = vst [vmem:[#allocation2] sm:$0xff] %v377
  %394 = vst [vmem:[#allocation2 + $0x8] sm:$0xff] %v378
  %395 = vst [vmem:[#allocation2 + $0x10] sm:$0xff] %v379
  %396 = vst [vmem:[#allocation2 + $0x18] sm:$0xff] %v380
  %397 = vst [vmem:[#allocation2 + $0x20] sm:$0xff] %v381
  %398 = vst [vmem:[#allocation2 + $0x28] sm:$0xff] %v382
  %399 = vst [vmem:[#allocation2 + $0x30] sm:$0xff] %v383
  %400 = vst [vmem:[#allocation2 + $0x38] sm:$0xff] %v384
  %401 = vst [vmem:[#allocation2 + $0x40] sm:$0xff] %v385
  %402 = vst [vmem:[#allocation2 + $0x48] sm:$0xff] %v386
  %403 = vst [vmem:[#allocation2 + $0x50] sm:$0xff] %v387
  %404 = vst [vmem:[#allocation2 + $0x58] sm:$0xff] %v388
  %405 = vst [vmem:[#allocation2 + $0x60] sm:$0xff] %v389
  %406 = vst [vmem:[#allocation2 + $0x68] sm:$0xff] %v390
  %407 = vst [vmem:[#allocation2 + $0x70] sm:$0xff] %v391
  %408 = vst [vmem:[#allocation2 + $0x78] sm:$0xff] %v392
  // Predicated region
  $region18: #{c3d_basic_block.7} parent=0 // pred_check
    %p409 = pneg %p14
  $region19: #{c3d_basic_block.7} parent=0 // pred_check_branch
    %411 = sbr.rel (%p409) target = $region21
  $region20: #{c3d_basic_block.7} parent=0 // pred_region
    %v412 = vld [vmem:[#allocation2] sm:$0xff]
    %v413 = vld [vmem:[#allocation2 + $0x8] sm:$0xff]
    %v414 = vld [vmem:[#allocation2 + $0x10] sm:$0xff]
    %v415 = vld [vmem:[#allocation2 + $0x18] sm:$0xff]
    %v416 = vld [vmem:[#allocation2 + $0x20] sm:$0xff]
    %v417 = vld [vmem:[#allocation2 + $0x28] sm:$0xff]
    %v418 = vld [vmem:[#allocation2 + $0x30] sm:$0xff]
    %v419 = vld [vmem:[#allocation2 + $0x38] sm:$0xff]
    %v420 = vld [vmem:[#allocation2 + $0x40] sm:$0xff]
    %v421 = vld [vmem:[#allocation2 + $0x48] sm:$0xff]
    %v422 = vld [vmem:[#allocation2 + $0x50] sm:$0xff]
    %v423 = vld [vmem:[#allocation2 + $0x58] sm:$0xff]
    %v424 = vld [vmem:[#allocation2 + $0x60] sm:$0xff]
    %v425 = vld [vmem:[#allocation2 + $0x68] sm:$0xff]
    %v426 = vld [vmem:[#allocation2 + $0x70] sm:$0xff]
    %v427 = vld [vmem:[#allocation2 + $0x78] sm:$0xff]
    %428 = vst [vmem:[%s2] sm:$0xff] %v412
    %429 = vst [vmem:[%s2 + $0x8] sm:$0xff] %v413
    %430 = vst [vmem:[%s2 + $0x10] sm:$0xff] %v414
    %431 = vst [vmem:[%s2 + $0x18] sm:$0xff] %v415
    %432 = vst [vmem:[%s2 + $0x20] sm:$0xff] %v416
    %433 = vst [vmem:[%s2 + $0x28] sm:$0xff] %v417
    %434 = vst [vmem:[%s2 + $0x30] sm:$0xff] %v418
    %435 = vst [vmem:[%s2 + $0x38] sm:$0xff] %v419
    %436 = vst [vmem:[%s2 + $0x40] sm:$0xff] %v420
    %437 = vst [vmem:[%s2 + $0x48] sm:$0xff] %v421
    %438 = vst [vmem:[%s2 + $0x50] sm:$0xff] %v422
    %439 = vst [vmem:[%s2 + $0x58] sm:$0xff] %v423
    %440 = vst [vmem:[%s2 + $0x60] sm:$0xff] %v424
    %441 = vst [vmem:[%s2 + $0x68] sm:$0xff] %v425
    %442 = vst [vmem:[%s2 + $0x70] sm:$0xff] %v426
    %443 = vst [vmem:[%s2 + $0x78] sm:$0xff] %v427
    %v444 = vadd.f32 %v412, %v413
    %v445 = vadd.f32 %v444, %v414
    %v446 = vadd.f32 %v445, %v415
    %v447 = vadd.f32 %v446, %v416
    %v448 = vadd.f32 %v447, %v417
    %v449 = vadd.f32 %v448, %v418
    %v450 = vadd.f32 %v449, %v419
    %v451 = vadd.f32 %v450, %v420
    %v452 = vadd.f32 %v451, %v421
    %v453 = vadd.f32 %v452, %v422
    %v454 = vadd.f32 %v453, %v423
    %v455 = vadd.f32 %v454, %v424
    %v456 = vadd.f32 %v455, %v425
    %v457 = vadd.f32 %v456, %v426
    %v458 = vadd.f32 %v457, %v427
    %v459 = vrot.slane %v458, 4
    %v460 = vadd.f32 %v458, %v459
    %v461 = vrot.slane %v460, 2
    %v462 = vadd.f32 %v460, %v461
    %v463 = vrot.slane %v462, 1
    %v464 = vadd.f32 %v462, %v463
    %v465 = vmul.f32 %v412, %v412
    %v466 = vmul.f32 %v413, %v413
    %v467 = vmul.f32 %v414, %v414
    %v468 = vmul.f32 %v415, %v415
    %v469 = vmul.f32 %v416, %v416
    %v470 = vmul.f32 %v417, %v417
    %v471 = vmul.f32 %v418, %v418
    %v472 = vmul.f32 %v419, %v419
    %v473 = vmul.f32 %v420, %v420
    %v474 = vmul.f32 %v421, %v421
    %v475 = vmul.f32 %v422, %v422
    %v476 = vmul.f32 %v423, %v423
    %v477 = vmul.f32 %v424, %v424
    %v478 = vmul.f32 %v425, %v425
    %v479 = vmul.f32 %v426, %v426
    %v480 = vmul.f32 %v427, %v427
    %v481 = vadd.f32 %v465, %v466
    %v482 = vadd.f32 %v481, %v467
    %v483 = vadd.f32 %v482, %v468
    %v484 = vadd.f32 %v483, %v469
    %v485 = vadd.f32 %v484, %v470
    %v486 = vadd.f32 %v485, %v471
    %v487 = vadd.f32 %v486, %v472
    %v488 = vadd.f32 %v487, %v473
    %v489 = vadd.f32 %v488, %v474
    %v490 = vadd.f32 %v489, %v475
    %v491 = vadd.f32 %v490, %v476
    %v492 = vadd.f32 %v491, %v477
    %v493 = vadd.f32 %v492, %v478
    %v494 = vadd.f32 %v493, %v479
    %v495 = vadd.f32 %v494, %v480
    %v496 = vrot.slane %v495, 4
    %v497 = vadd.f32 %v495, %v496
    %v498 = vrot.slane %v497, 2
    %v499 = vadd.f32 %v497, %v498
    %v500 = vrot.slane %v499, 1
    %v501 = vadd.f32 %v499, %v500
    %v502 = vlaneseq
    %v503 = vshrl.u32 %v502, 7
    %v504 = vld [vmem:[%s3] sm:$0xff]
    %vm505 = vcmp.eq.s32.totalorder %v503, 0
    %vm506 = vcmp.eq.s32.totalorder %v503, 1
    %v507 = vsel %vm506, %v501, 0.0
    %v508 = vsel %vm505, %v464, %v507
    %v509 = vadd.f32 %v504, %v508
    %510 = vst [vmem:[%s3] sm:$0xff] %v509
  $region21: #{c3d_basic_block.7} parent=0 // pred_fallthru
    _
  // Predicated region
  $region22: #{c3d_basic_block.7} parent=0 // pred_check
    _
  $region23: #{c3d_basic_block.7} parent=0 // pred_check_branch
    %512 = sbr.rel (0) target = $region25
  $region24: #{c3d_basic_block.7} parent=0 // pred_region
    _
  $region25: #{c3d_basic_block.7} parent=0 // pred_fallthru
    _
  // Predicated region
  $region26: #{c3d_basic_block.7} parent=0 // pred_check
    _
  $region27: #{c3d_basic_block.7} parent=0 // pred_check_branch
    %514 = sbr.rel (0) target = $region29
  $region28: #{c3d_basic_block.7} parent=0 // pred_region
    _
  $region29: #{c3d_basic_block.7} parent=0 // pred_fallthru
    _
  // Predicated region
  $region30: #{c3d_basic_block.7} parent=0 // pred_check
    _
  $region31: #{c3d_basic_block.7} parent=0 // pred_check_branch
    %516 = sbr.rel (0) target = $region33
  $region32: #{c3d_basic_block.7} parent=0 // pred_region
    _
  $region33: #{c3d_basic_block.7} parent=0 // pred_fallthru
    _
  // Predicated region
  $region34: #{c3d_basic_block.7} parent=0 // pred_check
    _
  $region35: #{c3d_basic_block.7} parent=0 // pred_check_branch
    %518 = sbr.rel (0) target = $region37
  $region36: #{c3d_basic_block.7} parent=0 // pred_region
    _
  $region37: #{c3d_basic_block.7} parent=0 // pred_fallthru
    _

// kernel: c3d_basic_block.9
$region0: #{c3d_basic_block.9}
  #allocation0 [shape = 'u32[]', space=smem, size = 0x4, offset = 0x4, fixed_abs, tag = 'smem constant byte address 0x4 - core index']
  #allocation1 [shape = 'u32[144,128]{1,0:T(1,128)}', space=vmem, size = 0x12000, scoped, tag = 'internal scratch']
  %s0 = inlined_call_operand.vmem [shape: f32[128,128], index: 0, kind: input, shape index: {}]
  %s1 = inlined_call_operand.vmem [shape: f32[128,128], index: 1, kind: input, shape index: {}]
  %s2 = inlined_call_operand.vmem [shape: f32[1,128], index: 2, kind: input, shape index: {}]
  %s3 = inlined_call_operand.vmem [shape: f32[1,128], index: 3, kind: input, shape index: {}]
  %s4 = inlined_call_operand.vmem [shape: f32[1,128], index: 4, kind: input, shape index: {}]
  %s5 = inlined_call_operand.vmem [shape: f32[1,128], index: 5, kind: input, shape index: {}]
  %s6 = inlined_call_operand.hbm [shape: f32[128,128], index: 6, kind: output, shape index: {}]
  %s7 = sld [smem:[#allocation0]]
  $region34: #{c3d_basic_block.9} parent=0
    _
  %s9 = ssub.s32 1, %s7
  %s10 = scalar_select 0, %s9, %s7
  $region1: #{c3d_basic_block.9} parent=0
    #allocation2 [shape = 'u8[65536]{0}', space=vmem, size = 0x10000, scoped, tag = 'output window, operand 0, single buffered']
    #allocation3 [shape = 's32[1]{0}', space=sflag, size = 0x4, scoped, tag = 'scoped memory for c3d_basic_block.9']
    %11 = vsyncpa [#allocation3], 0
    // Predicated region
    $region2: #{c3d_basic_block.9} parent=1 // pred_check
      _
    $region3: #{c3d_basic_block.9} parent=1 // pred_check_branch
      %13 = sbr.rel (0) target = $region5
    $region4: #{c3d_basic_block.9} parent=1 // pred_region
      _
    $region5: #{c3d_basic_block.9} parent=1 // pred_fallthru
      _
    // Predicated region
    $region6: #{c3d_basic_block.9} parent=1 // pred_check
      _
    $region7: #{c3d_basic_block.9} parent=1 // pred_check_branch
      %15 = sbr.rel (0) target = $region9
    $region8: #{c3d_basic_block.9} parent=1 // pred_region
      _
    $region9: #{c3d_basic_block.9} parent=1 // pred_fallthru
      _
    // Predicated region
    $region10: #{c3d_basic_block.9} parent=1 // pred_check
      _
    $region11: #{c3d_basic_block.9} parent=1 // pred_check_branch
      %17 = sbr.rel (0) target = $region13
    $region12: #{c3d_basic_block.9} parent=1 // pred_region
      _
    $region13: #{c3d_basic_block.9} parent=1 // pred_fallthru
      _
    // Predicated region
    $region14: #{c3d_basic_block.9} parent=1 // pred_check
      _
    $region15: #{c3d_basic_block.9} parent=1 // pred_check_branch
      %19 = sbr.rel (0) target = $region17
    $region16: #{c3d_basic_block.9} parent=1 // pred_region
      _
    $region17: #{c3d_basic_block.9} parent=1 // pred_fallthru
      _
    // Predicated region
    $region18: #{c3d_basic_block.9} parent=1 // pred_check
      _
    $region19: #{c3d_basic_block.9} parent=1 // pred_check_branch
      %21 = sbr.rel (0) target = $region21
    $region20: #{c3d_basic_block.9} parent=1 // pred_region
      _
    $region21: #{c3d_basic_block.9} parent=1 // pred_fallthru
      _
    // Predicated region
    $region22: #{c3d_basic_block.9} parent=1 // pred_check
      _
    $region23: #{c3d_basic_block.9} parent=1 // pred_check_branch
      %23 = sbr.rel (0) target = $region25
    $region24: #{c3d_basic_block.9} parent=1 // pred_region
      _
    $region25: #{c3d_basic_block.9} parent=1 // pred_fallthru
      _
    %v24 = vld [vmem:[%s0] sm:$0xff]
    %v25 = vld [vmem:[%s0 + $0x8] sm:$0xff]
    %v26 = vld [vmem:[%s0 + $0x10] sm:$0xff]
    %v27 = vld [vmem:[%s0 + $0x18] sm:$0xff]
    %v28 = vld [vmem:[%s0 + $0x20] sm:$0xff]
    %v29 = vld [vmem:[%s0 + $0x28] sm:$0xff]
    %v30 = vld [vmem:[%s0 + $0x30] sm:$0xff]
    %v31 = vld [vmem:[%s0 + $0x38] sm:$0xff]
    %v32 = vld [vmem:[%s0 + $0x40] sm:$0xff]
    %v33 = vld [vmem:[%s0 + $0x48] sm:$0xff]
    %v34 = vld [vmem:[%s0 + $0x50] sm:$0xff]
    %v35 = vld [vmem:[%s0 + $0x58] sm:$0xff]
    %v36 = vld [vmem:[%s0 + $0x60] sm:$0xff]
    %v37 = vld [vmem:[%s0 + $0x68] sm:$0xff]
    %v38 = vld [vmem:[%s0 + $0x70] sm:$0xff]
    %v39 = vld [vmem:[%s0 + $0x78] sm:$0xff]
    %v40 = vld [vmem:[%s2] sm:$0x1]
    %v42 = vlaneseq
    %v43 = vshrl.u32 %v42, 7
    %v44 = vsub.s32 0, %v43
    %v45 = vrot.slane %v40, %v44
    %v47 = vmul.f32 %v24, %v45
    %v48 = vmul.f32 %v25, %v45
    %v49 = vmul.f32 %v26, %v45
    %v50 = vmul.f32 %v27, %v45
    %v51 = vmul.f32 %v28, %v45
    %v52 = vmul.f32 %v29, %v45
    %v53 = vmul.f32 %v30, %v45
    %v54 = vmul.f32 %v31, %v45
    %v55 = vmul.f32 %v32, %v45
    %v56 = vmul.f32 %v33, %v45
    %v57 = vmul.f32 %v34, %v45
    %v58 = vmul.f32 %v35, %v45
    %v59 = vmul.f32 %v36, %v45
    %v60 = vmul.f32 %v37, %v45
    %v61 = vmul.f32 %v38, %v45
    %v62 = vmul.f32 %v39, %v45
    %v63 = vld [vmem:[%s3] sm:$0x1]
    %v65 = vlaneseq
    %v66 = vshrl.u32 %v65, 7
    %v67 = vsub.s32 0, %v66
    %v68 = vrot.slane %v63, %v67
    %v70 = vadd.f32 %v47, %v68
    %v71 = vadd.f32 %v48, %v68
    %v72 = vadd.f32 %v49, %v68
    %v73 = vadd.f32 %v50, %v68
    %v74 = vadd.f32 %v51, %v68
    %v75 = vadd.f32 %v52, %v68
    %v76 = vadd.f32 %v53, %v68
    %v77 = vadd.f32 %v54, %v68
    %v78 = vadd.f32 %v55, %v68
    %v79 = vadd.f32 %v56, %v68
    %v80 = vadd.f32 %v57, %v68
    %v81 = vadd.f32 %v58, %v68
    %v82 = vadd.f32 %v59, %v68
    %v83 = vadd.f32 %v60, %v68
    %v84 = vadd.f32 %v61, %v68
    %v85 = vadd.f32 %v62, %v68
    %v86 = vld [vmem:[%s1] sm:$0xff]
    %v87 = vld [vmem:[%s1 + $0x8] sm:$0xff]
    %v88 = vld [vmem:[%s1 + $0x10] sm:$0xff]
    %v89 = vld [vmem:[%s1 + $0x18] sm:$0xff]
    %v90 = vld [vmem:[%s1 + $0x20] sm:$0xff]
    %v91 = vld [vmem:[%s1 + $0x28] sm:$0xff]
    %v92 = vld [vmem:[%s1 + $0x30] sm:$0xff]
    %v93 = vld [vmem:[%s1 + $0x38] sm:$0xff]
    %v94 = vld [vmem:[%s1 + $0x40] sm:$0xff]
    %v95 = vld [vmem:[%s1 + $0x48] sm:$0xff]
    %v96 = vld [vmem:[%s1 + $0x50] sm:$0xff]
    %v97 = vld [vmem:[%s1 + $0x58] sm:$0xff]
    %v98 = vld [vmem:[%s1 + $0x60] sm:$0xff]
    %v99 = vld [vmem:[%s1 + $0x68] sm:$0xff]
    %v100 = vld [vmem:[%s1 + $0x70] sm:$0xff]
    %v101 = vld [vmem:[%s1 + $0x78] sm:$0xff]
    %v102 = vld [vmem:[%s4] sm:$0x1]
    %v104 = vlaneseq
    %v105 = vshrl.u32 %v104, 7
    %v106 = vsub.s32 0, %v105
    %v107 = vrot.slane %v102, %v106
    %v109 = vmul.f32 %v86, %v107
    %v110 = vmul.f32 %v87, %v107
    %v111 = vmul.f32 %v88, %v107
    %v112 = vmul.f32 %v89, %v107
    %v113 = vmul.f32 %v90, %v107
    %v114 = vmul.f32 %v91, %v107
    %v115 = vmul.f32 %v92, %v107
    %v116 = vmul.f32 %v93, %v107
    %v117 = vmul.f32 %v94, %v107
    %v118 = vmul.f32 %v95, %v107
    %v119 = vmul.f32 %v96, %v107
    %v120 = vmul.f32 %v97, %v107
    %v121 = vmul.f32 %v98, %v107
    %v122 = vmul.f32 %v99, %v107
    %v123 = vmul.f32 %v100, %v107
    %v124 = vmul.f32 %v101, %v107
    %v125 = vadd.f32 %v70, %v109
    %v126 = vadd.f32 %v71, %v110
    %v127 = vadd.f32 %v72, %v111
    %v128 = vadd.f32 %v73, %v112
    %v129 = vadd.f32 %v74, %v113
    %v130 = vadd.f32 %v75, %v114
    %v131 = vadd.f32 %v76, %v115
    %v132 = vadd.f32 %v77, %v116
    %v133 = vadd.f32 %v78, %v117
    %v134 = vadd.f32 %v79, %v118
    %v135 = vadd.f32 %v80, %v119
    %v136 = vadd.f32 %v81, %v120
    %v137 = vadd.f32 %v82, %v121
    %v138 = vadd.f32 %v83, %v122
    %v139 = vadd.f32 %v84, %v123
    %v140 = vadd.f32 %v85, %v124
    %v141 = vld [vmem:[%s5] sm:$0x1]
    %v143 = vlaneseq
    %v144 = vshrl.u32 %v143, 7
    %v145 = vsub.s32 0, %v144
    %v146 = vrot.slane %v141, %v145
    %v148 = vadd.f32 %v125, %v146
    %v149 = vadd.f32 %v126, %v146
    %v150 = vadd.f32 %v127, %v146
    %v151 = vadd.f32 %v128, %v146
    %v152 = vadd.f32 %v129, %v146
    %v153 = vadd.f32 %v130, %v146
    %v154 = vadd.f32 %v131, %v146
    %v155 = vadd.f32 %v132, %v146
    %v156 = vadd.f32 %v133, %v146
    %v157 = vadd.f32 %v134, %v146
    %v158 = vadd.f32 %v135, %v146
    %v159 = vadd.f32 %v136, %v146
    %v160 = vadd.f32 %v137, %v146
    %v161 = vadd.f32 %v138, %v146
    %v162 = vadd.f32 %v139, %v146
    %v163 = vadd.f32 %v140, %v146
    %v164 = vmax.f32 %v148, 0.0
    %v165 = vmax.f32 %v149, 0.0
    %v166 = vmax.f32 %v150, 0.0
    %v167 = vmax.f32 %v151, 0.0
    %v168 = vmax.f32 %v152, 0.0
    %v169 = vmax.f32 %v153, 0.0
    %v170 = vmax.f32 %v154, 0.0
    %v171 = vmax.f32 %v155, 0.0
    %v172 = vmax.f32 %v156, 0.0
    %v173 = vmax.f32 %v157, 0.0
    %v174 = vmax.f32 %v158, 0.0
    %v175 = vmax.f32 %v159, 0.0
    %v176 = vmax.f32 %v160, 0.0
    %v177 = vmax.f32 %v161, 0.0
    %v178 = vmax.f32 %v162, 0.0
    %v179 = vmax.f32 %v163, 0.0
    %180 = vst [vmem:[#allocation2] sm:$0xff] %v164
    %181 = vst [vmem:[#allocation2 + $0x8] sm:$0xff] %v165
    %182 = vst [vmem:[#allocation2 + $0x10] sm:$0xff] %v166
    %183 = vst [vmem:[#allocation2 + $0x18] sm:$0xff] %v167
    %184 = vst [vmem:[#allocation2 + $0x20] sm:$0xff] %v168
    %185 = vst [vmem:[#allocation2 + $0x28] sm:$0xff] %v169
    %186 = vst [vmem:[#allocation2 + $0x30] sm:$0xff] %v170
    %187 = vst [vmem:[#allocation2 + $0x38] sm:$0xff] %v171
    %188 = vst [vmem:[#allocation2 + $0x40] sm:$0xff] %v172
    %189 = vst [vmem:[#allocation2 + $0x48] sm:$0xff] %v173
    %190 = vst [vmem:[#allocation2 + $0x50] sm:$0xff] %v174
    %191 = vst [vmem:[#allocation2 + $0x58] sm:$0xff] %v175
    %192 = vst [vmem:[#allocation2 + $0x60] sm:$0xff] %v176
    %193 = vst [vmem:[#allocation2 + $0x68] sm:$0xff] %v177
    %194 = vst [vmem:[#allocation2 + $0x70] sm:$0xff] %v178
    %195 = vst [vmem:[#allocation2 + $0x78] sm:$0xff] %v179
    // Predicated region
    $region26: #{c3d_basic_block.9} parent=1 // pred_check
      _
    $region27: #{c3d_basic_block.9} parent=1 // pred_check_branch
      %197 = sbr.rel (0) target = $region29
    $region28: #{c3d_basic_block.9} parent=1 // pred_region
      %s199 = ssub.s32 2048, 2048
      %200 = vsyncadd [#allocation3], %s199
      %s201 = sshll.u32 [#allocation2], 4
      %s202 = int_to_ptr.vmem [resolvable:$true] %s201
      %207 = dma.vmem_to_hbm [thread:$0]  %s202, 2048, %s6, [#allocation3], 128, 128, 8
    $region29: #{c3d_basic_block.9} parent=1 // pred_fallthru
      _
    // Predicated region
    $region30: #{c3d_basic_block.9} parent=1 // pred_check
      _
    $region31: #{c3d_basic_block.9} parent=1 // pred_check_branch
      %209 = sbr.rel (0) target = $region33
    $region32: #{c3d_basic_block.9} parent=1 // pred_region
      %210 = dma.done [#allocation3], 2048
    $region33: #{c3d_basic_block.9} parent=1 // pred_fallthru
      _
    %211 = vsyncpa [#allocation3], 1

</llo_original>
